<compile_context>
chip_gen: v7x
topology: tpu7x:2x2x1
jax: 0.10.0
libtpu: 0.0.40
codegen_flags: <defaults>
</compile_context>

<pallas_src>
import functools
import math

import jax
import jax.numpy as jnp
from jax.experimental import pallas as pl
from jax.experimental.pallas import tpu as pltpu  # noqa: F401  (TPU backend)

# ----------------------------- tiny BERT config -----------------------------
VOCAB = 100
TYPE_VOCAB = 2
MAX_POS = 16
HIDDEN = 32
N_HEADS = 2
HEAD_DIM = HIDDEN // N_HEADS
N_LAYERS = 2
INTER = 64
LN_EPS = 1e-12
NEG_BIAS = -10000.0  # HF BERT additive mask value


# ------------------------------- fused kernel -------------------------------
def _simcse_kernel(
    emb_ref, attn_bias_ref, pool_wt_ref,
    emb_ln_g_ref, emb_ln_b_ref,
    wqkv_ref, bqkv_ref, wo_ref, bo_ref, ln1_g_ref, ln1_b_ref,
    w1_ref, b1_ref, w2_ref, b2_ref, ln2_g_ref, ln2_b_ref,
    pool_w_ref, pool_b_ref,
    out_ref,
    *, pooling, batch, seq,
):
    f32 = jnp.float32
    scale = 1.0 / math.sqrt(HEAD_DIM)

    def layernorm(x, g, b):
        mu = jnp.mean(x, axis=-1, keepdims=True)
        var = jnp.mean(jnp.square(x - mu), axis=-1, keepdims=True)
        return (x - mu) * jax.lax.rsqrt(var + LN_EPS) * g + b

    def gelu(x):
        # TODO(synk): HF BERT uses erf-GELU; tanh approximation used here.
        c = jnp.float32(0.7978845608028654)  # sqrt(2/pi)
        return 0.5 * x * (1.0 + jnp.tanh(c * (x + 0.044715 * x * x * x)))

    attn_bias = attn_bias_ref[...]            # (B*S, B*S) block-diag key-mask bias

    # Embedding LayerNorm (no residual).
    h = layernorm(emb_ref[...].astype(f32), emb_ln_g_ref[...], emb_ln_b_ref[...])

    h_first = None
    for l in range(N_LAYERS):
        # --- fused QKV projection: single MXU matmul for Q, K, V ---
        qkv = jnp.dot(h, wqkv_ref[l], preferred_element_type=f32) + bqkv_ref[l]

        # --- multi-head attention, batch fused via block-diagonal bias ---
        attn_out = bo_ref[l]                                   # (1, H), broadcasts
        for hi in range(N_HEADS):
            q = qkv[:, hi * HEAD_DIM:(hi + 1) * HEAD_DIM]
            k = qkv[:, HIDDEN + hi * HEAD_DIM:HIDDEN + (hi + 1) * HEAD_DIM]
            v = qkv[:, 2 * HIDDEN + hi * HEAD_DIM:2 * HIDDEN + (hi + 1) * HEAD_DIM]
            s = jax.lax.dot_general(                           # (B*S, B*S)
                q, k, dimension_numbers=(((1,), (1,)), ((), ())),
                preferred_element_type=f32) * scale + attn_bias
            s = s - jnp.max(s, axis=-1, keepdims=True)
            p = jnp.exp(s)
            p = p * pl.reciprocal(jnp.sum(p, axis=-1, keepdims=True), approx=True)
            ctx_h = jnp.dot(p, v, preferred_element_type=f32)  # (B*S, HEAD_DIM)
            # Fold head context straight into the output projection.
            attn_out = attn_out + jnp.dot(
                ctx_h, wo_ref[l, hi * HEAD_DIM:(hi + 1) * HEAD_DIM, :],
                preferred_element_type=f32)

        h = layernorm(attn_out + h, ln1_g_ref[l], ln1_b_ref[l])

        inter = gelu(jnp.dot(h, w1_ref[l], preferred_element_type=f32) + b1_ref[l])
        ff = jnp.dot(inter, w2_ref[l], preferred_element_type=f32) + b2_ref[l]
        h = layernorm(ff + h, ln2_g_ref[l], ln2_b_ref[l])

        if l == 0:
            h_first = h            # hidden_states[1] in HF numbering

    # -------------------------------- pooling --------------------------------
    if pooling == "cls":
        res = jnp.concatenate(
            [h[b * seq:b * seq + 1, :] for b in range(batch)], axis=0)
    elif pooling == "pooler":
        cls_rows = jnp.concatenate(
            [h[b * seq:b * seq + 1, :] for b in range(batch)], axis=0)
        res = jnp.tanh(
            jnp.dot(cls_rows, pool_w_ref[...], preferred_element_type=f32)
            + pool_b_ref[...])
    else:
        src = h if pooling == "last-avg" else 0.5 * (h_first + h)
        # pool_wt already folds mask and 1/len; one MXU matmul does the pooling.
        res = jnp.dot(pool_wt_ref[...], src, preferred_element_type=f32)

    out_ref[...] = res.astype(out_ref.dtype)   # single lane-contiguous store


# --------------------------------- wrapper -----------------------------------
@functools.partial(jax.jit, static_argnames=("pooling",))
def simcse_forward(packed, input_ids, attention_mask, token_type_ids, pooling):
    if pooling not in ("cls", "pooler", "last-avg", "first-last-avg"):
        raise ValueError(pooling)
    B, S = input_ids.shape

    # Embedding lookups (gathers) stay in plain XLA; everything else is fused.
    emb = (jnp.take(packed["word_emb"], input_ids, axis=0)
           + packed["pos_emb"][None, :S, :]
           + jnp.take(packed["type_emb"], token_type_ids, axis=0))
    emb = emb.reshape(B * S, HIDDEN)

    mask_f = attention_mask.astype(jnp.float32)                 # (B, S)
    batch_idx = jnp.repeat(jnp.arange(B), S)                    # (B*S,)

    # Block-diagonal additive attention bias: same-batch & unpadded key -> 0,
    # everything else -> -10000 (matches HF extended attention mask).
    same_batch = batch_idx[:, None] == batch_idx[None, :]
    key_ok = mask_f.reshape(B * S) > 0.5
    attn_bias = jnp.where(same_batch & key_ok[None, :],
                          0.0, NEG_BIAS).astype(jnp.float32)    # (B*S, B*S)

    # Masked-mean pooling as a matmul: pool_wt[b, b*S+t] = mask[b,t]/len(b).
    den = jnp.maximum(jnp.sum(mask_f, axis=-1, keepdims=True), 1.0)  # (B, 1)
    vals = (mask_f / den).reshape(B * S)
    batch_onehot = (batch_idx[None, :] == jnp.arange(B)[:, None]).astype(jnp.float32)
    pool_wt = batch_onehot * vals[None, :]                      # (B, B*S)

    kernel = functools.partial(_simcse_kernel, pooling=pooling, batch=B, seq=S)
    return pl.pallas_call(
        kernel,
        out_shape=jax.ShapeDtypeStruct((B, HIDDEN), jnp.float32),
    )(emb, attn_bias, pool_wt,
      packed["emb_ln_g"], packed["emb_ln_b"],
      packed["wqkv"], packed["bqkv"], packed["wo"], packed["bo"],
      packed["ln1_g"], packed["ln1_b"],
      packed["w1"], packed["b1"], packed["w2"], packed["b2"],
      packed["ln2_g"], packed["ln2_b"],
      packed["pool_w"], packed["pool_b"])


# --------------------------- parameter construction --------------------------
def init_params(key):
    def nrm(k, shape):
        return (jax.random.normal(k, shape, jnp.float32) * 0.02).astype(jnp.float32)

    keys = iter(jax.random.split(key, 4 + N_LAYERS * 6))
    params = {
        "word_emb": nrm(next(keys), (VOCAB, HIDDEN)),
        "pos_emb": nrm(next(keys), (MAX_POS, HIDDEN)),
        "type_emb": nrm(next(keys), (TYPE_VOCAB, HIDDEN)),
        "emb_ln_g": jnp.ones((HIDDEN,), jnp.float32),
        "emb_ln_b": jnp.zeros((HIDDEN,), jnp.float32),
        "pooler_w": nrm(next(keys), (HIDDEN, HIDDEN)),
        "pooler_b": jnp.zeros((HIDDEN,), jnp.float32),
        "layers": [],
    }
    for _ in range(N_LAYERS):
        params["layers"].append({
            "q_w": nrm(next(keys), (HIDDEN, HIDDEN)), "q_b": jnp.zeros((HIDDEN,), jnp.float32),
            "k_w": nrm(next(keys), (HIDDEN, HIDDEN)), "k_b": jnp.zeros((HIDDEN,), jnp.float32),
            "v_w": nrm(next(keys), (HIDDEN, HIDDEN)), "v_b": jnp.zeros((HIDDEN,), jnp.float32),
            "ao_w": nrm(next(keys), (HIDDEN, HIDDEN)), "ao_b": jnp.zeros((HIDDEN,), jnp.float32),
            "attn_ln_g": jnp.ones((HIDDEN,), jnp.float32),
            "attn_ln_b": jnp.zeros((HIDDEN,), jnp.float32),
            "ff_w1": nrm(next(keys), (HIDDEN, INTER)), "ff_b1": jnp.zeros((INTER,), jnp.float32),
            "ff_w2": nrm(next(keys), (INTER, HIDDEN)), "ff_b2": jnp.zeros((HIDDEN,), jnp.float32),
            "ffn_ln_g": jnp.ones((HIDDEN,), jnp.float32),
            "ffn_ln_b": jnp.zeros((HIDDEN,), jnp.float32),
        })
    return params


def pack_params(p):
    """Stack per-layer weights with a leading layer axis and fuse Q/K/V."""
    def stk(fn):
        return jnp.stack([fn(l) for l in p["layers"]])

    return {
        "word_emb": p["word_emb"],
        "pos_emb": p["pos_emb"],
        "type_emb": p["type_emb"],
        "emb_ln_g": p["emb_ln_g"].reshape(1, HIDDEN),
        "emb_ln_b": p["emb_ln_b"].reshape(1, HIDDEN),
        "pool_w": p["pooler_w"],
        "pool_b": p["pooler_b"].reshape(1, HIDDEN),
        "wqkv": stk(lambda l: jnp.concatenate([l["q_w"], l["k_w"], l["v_w"]], axis=1)),
        "bqkv": stk(lambda l: jnp.concatenate(
            [l["q_b"], l["k_b"], l["v_b"]]).reshape(1, 3 * HIDDEN)),
        "wo": stk(lambda l: l["ao_w"]),
        "bo": stk(lambda l: l["ao_b"].reshape(1, HIDDEN)),
        "ln1_g": stk(lambda l: l["attn_ln_g"].reshape(1, HIDDEN)),
        "ln1_b": stk(lambda l: l["attn_ln_b"].reshape(1, HIDDEN)),
        "w1": stk(lambda l: l["ff_w1"]),
        "b1": stk(lambda l: l["ff_b1"].reshape(1, INTER)),
        "w2": stk(lambda l: l["ff_w2"]),
        "b2": stk(lambda l: l["ff_b2"].reshape(1, HIDDEN)),
        "ln2_g": stk(lambda l: l["ffn_ln_g"].reshape(1, HIDDEN)),
        "ln2_b": stk(lambda l: l["ffn_ln_b"].reshape(1, HIDDEN)),
    }


# ----------------------------------- main ------------------------------------
if __name__ == "__main__":
    B, S = 2, 8
    key = jax.random.PRNGKey(0)
    k_param, k_ids = jax.random.split(key)

    packed = pack_params(init_params(k_param))
    input_ids = jax.random.randint(k_ids, (B, S), 0, VOCAB, dtype=jnp.int32)
    attention_mask = jnp.array([[1, 1, 1, 1, 1, 1, 1, 1],
                                [1, 1, 1, 1, 1, 1, 0, 0]], dtype=jnp.int32)
    token_type_ids = jnp.zeros((B, S), dtype=jnp.int32)

    for pooling in ("cls", "pooler", "last-avg", "first-last-avg"):
        out = simcse_forward(packed, input_ids, attention_mask, token_type_ids,
                             pooling=pooling)
        out = jax.block_until_ready(out)
        assert out.shape == (B, HIDDEN), out.shape
        assert bool(jnp.all(jnp.isfinite(out)))

    print("KERNEL_OK")
</pallas_src>

<mosaic_0001>
module attributes {stable_mosaic.version = 11 : i64} {
  func.func @_simcse_kernel(%arg0: memref<16x32xf32, #tpu.memory_space<vmem>>, %arg1: memref<16x16xf32, #tpu.memory_space<vmem>>, %arg2: memref<2x16xf32, #tpu.memory_space<vmem>>, %arg3: memref<1x32xf32, #tpu.memory_space<vmem>>, %arg4: memref<1x32xf32, #tpu.memory_space<vmem>>, %arg5: memref<2x32x96xf32, #tpu.memory_space<vmem>>, %arg6: memref<2x1x96xf32, #tpu.memory_space<vmem>>, %arg7: memref<2x32x32xf32, #tpu.memory_space<vmem>>, %arg8: memref<2x1x32xf32, #tpu.memory_space<vmem>>, %arg9: memref<2x1x32xf32, #tpu.memory_space<vmem>>, %arg10: memref<2x1x32xf32, #tpu.memory_space<vmem>>, %arg11: memref<2x32x64xf32, #tpu.memory_space<vmem>>, %arg12: memref<2x1x64xf32, #tpu.memory_space<vmem>>, %arg13: memref<2x64x32xf32, #tpu.memory_space<vmem>>, %arg14: memref<2x1x32xf32, #tpu.memory_space<vmem>>, %arg15: memref<2x1x32xf32, #tpu.memory_space<vmem>>, %arg16: memref<2x1x32xf32, #tpu.memory_space<vmem>>, %arg17: memref<32x32xf32, #tpu.memory_space<vmem>>, %arg18: memref<1x32xf32, #tpu.memory_space<vmem>>, %arg19: memref<2x32xf32, #tpu.memory_space<vmem>>) attributes {dimension_semantics = [], scalar_prefetch = 0 : i64, scratch_operands = 0 : i64, tpu.core_type = #tpu.core_type<tc>} {
    %c0 = arith.constant 0 : index
    %c0_0 = arith.constant 0 : index
    %0 = vector.load %arg1[%c0, %c0_0] : memref<16x16xf32, #tpu.memory_space<vmem>>, vector<16x16xf32>
    %c0_1 = arith.constant 0 : index
    %c0_2 = arith.constant 0 : index
    %1 = vector.load %arg0[%c0_1, %c0_2] : memref<16x32xf32, #tpu.memory_space<vmem>>, vector<16x32xf32>
    %c0_3 = arith.constant 0 : index
    %c0_4 = arith.constant 0 : index
    %2 = vector.load %arg3[%c0_3, %c0_4] : memref<1x32xf32, #tpu.memory_space<vmem>>, vector<1x32xf32>
    %c0_5 = arith.constant 0 : index
    %c0_6 = arith.constant 0 : index
    %3 = vector.load %arg4[%c0_5, %c0_6] : memref<1x32xf32, #tpu.memory_space<vmem>>, vector<1x32xf32>
    %cst = arith.constant dense<0.000000e+00> : vector<16xf32>
    %4 = vector.multi_reduction <add>, %1, %cst [1] : vector<16x32xf32> to vector<16xf32>
    %5 = vector.shape_cast %4 : vector<16xf32> to vector<16x1xf32>
    %cst_7 = arith.constant 3.200000e+01 : f32
    %6 = vector.broadcast %cst_7 : f32 to vector<16x1xf32>
    %7 = arith.divf %5, %6 : vector<16x1xf32>
    %8 = vector.broadcast %7 : vector<16x1xf32> to vector<16x32xf32>
    %9 = arith.subf %1, %8 : vector<16x32xf32>
    %10 = arith.mulf %9, %9 : vector<16x32xf32>
    %cst_8 = arith.constant dense<0.000000e+00> : vector<16xf32>
    %11 = vector.multi_reduction <add>, %10, %cst_8 [1] : vector<16x32xf32> to vector<16xf32>
    %12 = vector.shape_cast %11 : vector<16xf32> to vector<16x1xf32>
    %cst_9 = arith.constant 3.200000e+01 : f32
    %13 = vector.broadcast %cst_9 : f32 to vector<16x1xf32>
    %14 = arith.divf %12, %13 : vector<16x1xf32>
    %15 = vector.broadcast %7 : vector<16x1xf32> to vector<16x32xf32>
    %16 = arith.subf %1, %15 : vector<16x32xf32>
    %cst_10 = arith.constant 9.99999996E-13 : f32
    %17 = vector.broadcast %cst_10 : f32 to vector<16x1xf32>
    %18 = arith.addf %14, %17 : vector<16x1xf32>
    %19 = math.rsqrt %18 : vector<16x1xf32>
    %20 = vector.broadcast %19 : vector<16x1xf32> to vector<16x32xf32>
    %21 = arith.mulf %16, %20 : vector<16x32xf32>
    %22 = vector.broadcast %2 : vector<1x32xf32> to vector<16x32xf32>
    %23 = arith.mulf %21, %22 : vector<16x32xf32>
    %24 = vector.broadcast %3 : vector<1x32xf32> to vector<16x32xf32>
    %25 = arith.addf %23, %24 : vector<16x32xf32>
    %c0_11 = arith.constant 0 : index
    %c0_12 = arith.constant 0 : index
    %c0_13 = arith.constant 0 : index
    %26 = vector.load %arg5[%c0_11, %c0_12, %c0_13] : memref<2x32x96xf32, #tpu.memory_space<vmem>>, vector<1x32x96xf32>
    %27 = vector.shape_cast %26 : vector<1x32x96xf32> to vector<32x96xf32>
    %cst_14 = arith.constant dense<0.000000e+00> : vector<16x96xf32>
    %28 = tpu.matmul %25, %27, %cst_14 {dimension_numbers = #tpu.dot_dimension_numbers<[1], [0], [0], [1], [0, 0, 1, 1], [], []>} : vector<16x32xf32>, vector<32x96xf32>, vector<16x96xf32> -> vector<16x96xf32>
    %c0_15 = arith.constant 0 : index
    %c0_16 = arith.constant 0 : index
    %c0_17 = arith.constant 0 : index
    %29 = vector.load %arg6[%c0_15, %c0_16, %c0_17] : memref<2x1x96xf32, #tpu.memory_space<vmem>>, vector<1x1x96xf32>
    %30 = vector.shape_cast %29 : vector<1x1x96xf32> to vector<1x96xf32>
    %31 = vector.broadcast %30 : vector<1x96xf32> to vector<16x96xf32>
    %32 = arith.addf %28, %31 : vector<16x96xf32>
    %c0_18 = arith.constant 0 : index
    %c0_19 = arith.constant 0 : index
    %c0_20 = arith.constant 0 : index
    %33 = vector.load %arg8[%c0_18, %c0_19, %c0_20] : memref<2x1x32xf32, #tpu.memory_space<vmem>>, vector<1x1x32xf32>
    %34 = vector.shape_cast %33 : vector<1x1x32xf32> to vector<1x32xf32>
    %35 = vector.extract_strided_slice %32 {offsets = [0, 0], sizes = [16, 16], strides = [1, 1]} : vector<16x96xf32> to vector<16x16xf32>
    %36 = vector.extract_strided_slice %32 {offsets = [0, 32], sizes = [16, 16], strides = [1, 1]} : vector<16x96xf32> to vector<16x16xf32>
    %37 = vector.extract_strided_slice %32 {offsets = [0, 64], sizes = [16, 16], strides = [1, 1]} : vector<16x96xf32> to vector<16x16xf32>
    %cst_21 = arith.constant dense<0.000000e+00> : vector<16x16xf32>
    %38 = tpu.matmul %35, %36, %cst_21 {dimension_numbers = #tpu.dot_dimension_numbers<[1], [1], [0], [0], [0, 0, 1, 0], [], []>} : vector<16x16xf32>, vector<16x16xf32>, vector<16x16xf32> -> vector<16x16xf32>
    %cst_22 = arith.constant 2.500000e-01 : f32
    %39 = vector.broadcast %cst_22 : f32 to vector<16x16xf32>
    %40 = arith.mulf %38, %39 : vector<16x16xf32>
    %41 = arith.addf %40, %0 : vector<16x16xf32>
    %cst_23 = arith.constant dense<0xFF800000> : vector<16xf32>
    %42 = vector.multi_reduction <maximumf>, %41, %cst_23 [1] : vector<16x16xf32> to vector<16xf32>
    %43 = vector.shape_cast %42 : vector<16xf32> to vector<16x1xf32>
    %44 = vector.broadcast %43 : vector<16x1xf32> to vector<16x16xf32>
    %45 = arith.subf %41, %44 : vector<16x16xf32>
    %46 = math.exp %45 : vector<16x16xf32>
    %cst_24 = arith.constant dense<0.000000e+00> : vector<16xf32>
    %47 = vector.multi_reduction <add>, %46, %cst_24 [1] : vector<16x16xf32> to vector<16xf32>
    %48 = vector.shape_cast %47 : vector<16xf32> to vector<16x1xf32>
    %49 = tpu.reciprocal %48 {approx = true} : vector<16x1xf32> -> vector<16x1xf32>
    %50 = vector.broadcast %49 : vector<16x1xf32> to vector<16x16xf32>
    %51 = arith.mulf %46, %50 : vector<16x16xf32>
    %cst_25 = arith.constant dense<0.000000e+00> : vector<16x16xf32>
    %52 = tpu.matmul %51, %37, %cst_25 {dimension_numbers = #tpu.dot_dimension_numbers<[1], [0], [0], [1], [0, 0, 1, 1], [], []>} : vector<16x16xf32>, vector<16x16xf32>, vector<16x16xf32> -> vector<16x16xf32>
    %c0_26 = arith.constant 0 : index
    %c0_27 = arith.constant 0 : index
    %c0_28 = arith.constant 0 : index
    %53 = vector.load %arg7[%c0_26, %c0_27, %c0_28] : memref<2x32x32xf32, #tpu.memory_space<vmem>>, vector<1x16x32xf32>
    %54 = vector.shape_cast %53 : vector<1x16x32xf32> to vector<16x32xf32>
    %cst_29 = arith.constant dense<0.000000e+00> : vector<16x32xf32>
    %55 = tpu.matmul %52, %54, %cst_29 {dimension_numbers = #tpu.dot_dimension_numbers<[1], [0], [0], [1], [0, 0, 1, 1], [], []>} : vector<16x16xf32>, vector<16x32xf32>, vector<16x32xf32> -> vector<16x32xf32>
    %56 = vector.broadcast %34 : vector<1x32xf32> to vector<16x32xf32>
    %57 = arith.addf %56, %55 : vector<16x32xf32>
    %58 = vector.extract_strided_slice %32 {offsets = [0, 16], sizes = [16, 16], strides = [1, 1]} : vector<16x96xf32> to vector<16x16xf32>
    %59 = vector.extract_strided_slice %32 {offsets = [0, 48], sizes = [16, 16], strides = [1, 1]} : vector<16x96xf32> to vector<16x16xf32>
    %60 = vector.extract_strided_slice %32 {offsets = [0, 80], sizes = [16, 16], strides = [1, 1]} : vector<16x96xf32> to vector<16x16xf32>
    %cst_30 = arith.constant dense<0.000000e+00> : vector<16x16xf32>
    %61 = tpu.matmul %58, %59, %cst_30 {dimension_numbers = #tpu.dot_dimension_numbers<[1], [1], [0], [0], [0, 0, 1, 0], [], []>} : vector<16x16xf32>, vector<16x16xf32>, vector<16x16xf32> -> vector<16x16xf32>
    %cst_31 = arith.constant 2.500000e-01 : f32
    %62 = vector.broadcast %cst_31 : f32 to vector<16x16xf32>
    %63 = arith.mulf %61, %62 : vector<16x16xf32>
    %64 = arith.addf %63, %0 : vector<16x16xf32>
    %cst_32 = arith.constant dense<0xFF800000> : vector<16xf32>
    %65 = vector.multi_reduction <maximumf>, %64, %cst_32 [1] : vector<16x16xf32> to vector<16xf32>
    %66 = vector.shape_cast %65 : vector<16xf32> to vector<16x1xf32>
    %67 = vector.broadcast %66 : vector<16x1xf32> to vector<16x16xf32>
    %68 = arith.subf %64, %67 : vector<16x16xf32>
    %69 = math.exp %68 : vector<16x16xf32>
    %cst_33 = arith.constant dense<0.000000e+00> : vector<16xf32>
    %70 = vector.multi_reduction <add>, %69, %cst_33 [1] : vector<16x16xf32> to vector<16xf32>
    %71 = vector.shape_cast %70 : vector<16xf32> to vector<16x1xf32>
    %72 = tpu.reciprocal %71 {approx = true} : vector<16x1xf32> -> vector<16x1xf32>
    %73 = vector.broadcast %72 : vector<16x1xf32> to vector<16x16xf32>
    %74 = arith.mulf %69, %73 : vector<16x16xf32>
    %cst_34 = arith.constant dense<0.000000e+00> : vector<16x16xf32>
    %75 = tpu.matmul %74, %60, %cst_34 {dimension_numbers = #tpu.dot_dimension_numbers<[1], [0], [0], [1], [0, 0, 1, 1], [], []>} : vector<16x16xf32>, vector<16x16xf32>, vector<16x16xf32> -> vector<16x16xf32>
    %c0_35 = arith.constant 0 : index
    %c16 = arith.constant 16 : index
    %c0_36 = arith.constant 0 : index
    %76 = vector.load %arg7[%c0_35, %c16, %c0_36] : memref<2x32x32xf32, #tpu.memory_space<vmem>>, vector<1x16x32xf32>
    %77 = vector.shape_cast %76 : vector<1x16x32xf32> to vector<16x32xf32>
    %cst_37 = arith.constant dense<0.000000e+00> : vector<16x32xf32>
    %78 = tpu.matmul %75, %77, %cst_37 {dimension_numbers = #tpu.dot_dimension_numbers<[1], [0], [0], [1], [0, 0, 1, 1], [], []>} : vector<16x16xf32>, vector<16x32xf32>, vector<16x32xf32> -> vector<16x32xf32>
    %79 = arith.addf %57, %78 : vector<16x32xf32>
    %80 = arith.addf %79, %25 : vector<16x32xf32>
    %c0_38 = arith.constant 0 : index
    %c0_39 = arith.constant 0 : index
    %c0_40 = arith.constant 0 : index
    %81 = vector.load %arg9[%c0_38, %c0_39, %c0_40] : memref<2x1x32xf32, #tpu.memory_space<vmem>>, vector<1x1x32xf32>
    %82 = vector.shape_cast %81 : vector<1x1x32xf32> to vector<1x32xf32>
    %c0_41 = arith.constant 0 : index
    %c0_42 = arith.constant 0 : index
    %c0_43 = arith.constant 0 : index
    %83 = vector.load %arg10[%c0_41, %c0_42, %c0_43] : memref<2x1x32xf32, #tpu.memory_space<vmem>>, vector<1x1x32xf32>
    %84 = vector.shape_cast %83 : vector<1x1x32xf32> to vector<1x32xf32>
    %cst_44 = arith.constant dense<0.000000e+00> : vector<16xf32>
    %85 = vector.multi_reduction <add>, %80, %cst_44 [1] : vector<16x32xf32> to vector<16xf32>
    %86 = vector.shape_cast %85 : vector<16xf32> to vector<16x1xf32>
    %cst_45 = arith.constant 3.200000e+01 : f32
    %87 = vector.broadcast %cst_45 : f32 to vector<16x1xf32>
    %88 = arith.divf %86, %87 : vector<16x1xf32>
    %89 = vector.broadcast %88 : vector<16x1xf32> to vector<16x32xf32>
    %90 = arith.subf %80, %89 : vector<16x32xf32>
    %91 = arith.mulf %90, %90 : vector<16x32xf32>
    %cst_46 = arith.constant dense<0.000000e+00> : vector<16xf32>
    %92 = vector.multi_reduction <add>, %91, %cst_46 [1] : vector<16x32xf32> to vector<16xf32>
    %93 = vector.shape_cast %92 : vector<16xf32> to vector<16x1xf32>
    %cst_47 = arith.constant 3.200000e+01 : f32
    %94 = vector.broadcast %cst_47 : f32 to vector<16x1xf32>
    %95 = arith.divf %93, %94 : vector<16x1xf32>
    %96 = vector.broadcast %88 : vector<16x1xf32> to vector<16x32xf32>
    %97 = arith.subf %80, %96 : vector<16x32xf32>
    %cst_48 = arith.constant 9.99999996E-13 : f32
    %98 = vector.broadcast %cst_48 : f32 to vector<16x1xf32>
    %99 = arith.addf %95, %98 : vector<16x1xf32>
    %100 = math.rsqrt %99 : vector<16x1xf32>
    %101 = vector.broadcast %100 : vector<16x1xf32> to vector<16x32xf32>
    %102 = arith.mulf %97, %101 : vector<16x32xf32>
    %103 = vector.broadcast %82 : vector<1x32xf32> to vector<16x32xf32>
    %104 = arith.mulf %102, %103 : vector<16x32xf32>
    %105 = vector.broadcast %84 : vector<1x32xf32> to vector<16x32xf32>
    %106 = arith.addf %104, %105 : vector<16x32xf32>
    %c0_49 = arith.constant 0 : index
    %c0_50 = arith.constant 0 : index
    %c0_51 = arith.constant 0 : index
    %107 = vector.load %arg11[%c0_49, %c0_50, %c0_51] : memref<2x32x64xf32, #tpu.memory_space<vmem>>, vector<1x32x64xf32>
    %108 = vector.shape_cast %107 : vector<1x32x64xf32> to vector<32x64xf32>
    %cst_52 = arith.constant dense<0.000000e+00> : vector<16x64xf32>
    %109 = tpu.matmul %106, %108, %cst_52 {dimension_numbers = #tpu.dot_dimension_numbers<[1], [0], [0], [1], [0, 0, 1, 1], [], []>} : vector<16x32xf32>, vector<32x64xf32>, vector<16x64xf32> -> vector<16x64xf32>
    %c0_53 = arith.constant 0 : index
    %c0_54 = arith.constant 0 : index
    %c0_55 = arith.constant 0 : index
    %110 = vector.load %arg12[%c0_53, %c0_54, %c0_55] : memref<2x1x64xf32, #tpu.memory_space<vmem>>, vector<1x1x64xf32>
    %111 = vector.shape_cast %110 : vector<1x1x64xf32> to vector<1x64xf32>
    %112 = vector.broadcast %111 : vector<1x64xf32> to vector<16x64xf32>
    %113 = arith.addf %109, %112 : vector<16x64xf32>
    %cst_56 = arith.constant 5.000000e-01 : f32
    %114 = vector.broadcast %cst_56 : f32 to vector<16x64xf32>
    %115 = arith.mulf %114, %113 : vector<16x64xf32>
    %cst_57 = arith.constant 4.471500e-02 : f32
    %116 = vector.broadcast %cst_57 : f32 to vector<16x64xf32>
    %117 = arith.mulf %116, %113 : vector<16x64xf32>
    %118 = arith.mulf %117, %113 : vector<16x64xf32>
    %119 = arith.mulf %118, %113 : vector<16x64xf32>
    %120 = arith.addf %113, %119 : vector<16x64xf32>
    %cst_58 = arith.constant 0.797884583 : f32
    %121 = vector.broadcast %cst_58 : f32 to vector<16x64xf32>
    %122 = arith.mulf %121, %120 : vector<16x64xf32>
    %123 = math.tanh %122 : vector<16x64xf32>
    %cst_59 = arith.constant 1.000000e+00 : f32
    %124 = vector.broadcast %cst_59 : f32 to vector<16x64xf32>
    %125 = arith.addf %124, %123 : vector<16x64xf32>
    %126 = arith.mulf %115, %125 : vector<16x64xf32>
    %c0_60 = arith.constant 0 : index
    %c0_61 = arith.constant 0 : index
    %c0_62 = arith.constant 0 : index
    %127 = vector.load %arg13[%c0_60, %c0_61, %c0_62] : memref<2x64x32xf32, #tpu.memory_space<vmem>>, vector<1x64x32xf32>
    %128 = vector.shape_cast %127 : vector<1x64x32xf32> to vector<64x32xf32>
    %cst_63 = arith.constant dense<0.000000e+00> : vector<16x32xf32>
    %129 = tpu.matmul %126, %128, %cst_63 {dimension_numbers = #tpu.dot_dimension_numbers<[1], [0], [0], [1], [0, 0, 1, 1], [], []>} : vector<16x64xf32>, vector<64x32xf32>, vector<16x32xf32> -> vector<16x32xf32>
    %c0_64 = arith.constant 0 : index
    %c0_65 = arith.constant 0 : index
    %c0_66 = arith.constant 0 : index
    %130 = vector.load %arg14[%c0_64, %c0_65, %c0_66] : memref<2x1x32xf32, #tpu.memory_space<vmem>>, vector<1x1x32xf32>
    %131 = vector.shape_cast %130 : vector<1x1x32xf32> to vector<1x32xf32>
    %132 = vector.broadcast %131 : vector<1x32xf32> to vector<16x32xf32>
    %133 = arith.addf %129, %132 : vector<16x32xf32>
    %134 = arith.addf %133, %106 : vector<16x32xf32>
    %c0_67 = arith.constant 0 : index
    %c0_68 = arith.constant 0 : index
    %c0_69 = arith.constant 0 : index
    %135 = vector.load %arg15[%c0_67, %c0_68, %c0_69] : memref<2x1x32xf32, #tpu.memory_space<vmem>>, vector<1x1x32xf32>
    %136 = vector.shape_cast %135 : vector<1x1x32xf32> to vector<1x32xf32>
    %c0_70 = arith.constant 0 : index
    %c0_71 = arith.constant 0 : index
    %c0_72 = arith.constant 0 : index
    %137 = vector.load %arg16[%c0_70, %c0_71, %c0_72] : memref<2x1x32xf32, #tpu.memory_space<vmem>>, vector<1x1x32xf32>
    %138 = vector.shape_cast %137 : vector<1x1x32xf32> to vector<1x32xf32>
    %cst_73 = arith.constant dense<0.000000e+00> : vector<16xf32>
    %139 = vector.multi_reduction <add>, %134, %cst_73 [1] : vector<16x32xf32> to vector<16xf32>
    %140 = vector.shape_cast %139 : vector<16xf32> to vector<16x1xf32>
    %cst_74 = arith.constant 3.200000e+01 : f32
    %141 = vector.broadcast %cst_74 : f32 to vector<16x1xf32>
    %142 = arith.divf %140, %141 : vector<16x1xf32>
    %143 = vector.broadcast %142 : vector<16x1xf32> to vector<16x32xf32>
    %144 = arith.subf %134, %143 : vector<16x32xf32>
    %145 = arith.mulf %144, %144 : vector<16x32xf32>
    %cst_75 = arith.constant dense<0.000000e+00> : vector<16xf32>
    %146 = vector.multi_reduction <add>, %145, %cst_75 [1] : vector<16x32xf32> to vector<16xf32>
    %147 = vector.shape_cast %146 : vector<16xf32> to vector<16x1xf32>
    %cst_76 = arith.constant 3.200000e+01 : f32
    %148 = vector.broadcast %cst_76 : f32 to vector<16x1xf32>
    %149 = arith.divf %147, %148 : vector<16x1xf32>
    %150 = vector.broadcast %142 : vector<16x1xf32> to vector<16x32xf32>
    %151 = arith.subf %134, %150 : vector<16x32xf32>
    %cst_77 = arith.constant 9.99999996E-13 : f32
    %152 = vector.broadcast %cst_77 : f32 to vector<16x1xf32>
    %153 = arith.addf %149, %152 : vector<16x1xf32>
    %154 = math.rsqrt %153 : vector<16x1xf32>
    %155 = vector.broadcast %154 : vector<16x1xf32> to vector<16x32xf32>
    %156 = arith.mulf %151, %155 : vector<16x32xf32>
    %157 = vector.broadcast %136 : vector<1x32xf32> to vector<16x32xf32>
    %158 = arith.mulf %156, %157 : vector<16x32xf32>
    %159 = vector.broadcast %138 : vector<1x32xf32> to vector<16x32xf32>
    %160 = arith.addf %158, %159 : vector<16x32xf32>
    %c1 = arith.constant 1 : index
    %c0_78 = arith.constant 0 : index
    %c0_79 = arith.constant 0 : index
    %161 = vector.load %arg5[%c1, %c0_78, %c0_79] : memref<2x32x96xf32, #tpu.memory_space<vmem>>, vector<1x32x96xf32>
    %162 = vector.shape_cast %161 : vector<1x32x96xf32> to vector<32x96xf32>
    %cst_80 = arith.constant dense<0.000000e+00> : vector<16x96xf32>
    %163 = tpu.matmul %160, %162, %cst_80 {dimension_numbers = #tpu.dot_dimension_numbers<[1], [0], [0], [1], [0, 0, 1, 1], [], []>} : vector<16x32xf32>, vector<32x96xf32>, vector<16x96xf32> -> vector<16x96xf32>
    %c1_81 = arith.constant 1 : index
    %c0_82 = arith.constant 0 : index
    %c0_83 = arith.constant 0 : index
    %164 = vector.load %arg6[%c1_81, %c0_82, %c0_83] : memref<2x1x96xf32, #tpu.memory_space<vmem>>, vector<1x1x96xf32>
    %165 = vector.shape_cast %164 : vector<1x1x96xf32> to vector<1x96xf32>
    %166 = vector.broadcast %165 : vector<1x96xf32> to vector<16x96xf32>
    %167 = arith.addf %163, %166 : vector<16x96xf32>
    %c1_84 = arith.constant 1 : index
    %c0_85 = arith.constant 0 : index
    %c0_86 = arith.constant 0 : index
    %168 = vector.load %arg8[%c1_84, %c0_85, %c0_86] : memref<2x1x32xf32, #tpu.memory_space<vmem>>, vector<1x1x32xf32>
    %169 = vector.shape_cast %168 : vector<1x1x32xf32> to vector<1x32xf32>
    %170 = vector.extract_strided_slice %167 {offsets = [0, 0], sizes = [16, 16], strides = [1, 1]} : vector<16x96xf32> to vector<16x16xf32>
    %171 = vector.extract_strided_slice %167 {offsets = [0, 32], sizes = [16, 16], strides = [1, 1]} : vector<16x96xf32> to vector<16x16xf32>
    %172 = vector.extract_strided_slice %167 {offsets = [0, 64], sizes = [16, 16], strides = [1, 1]} : vector<16x96xf32> to vector<16x16xf32>
    %cst_87 = arith.constant dense<0.000000e+00> : vector<16x16xf32>
    %173 = tpu.matmul %170, %171, %cst_87 {dimension_numbers = #tpu.dot_dimension_numbers<[1], [1], [0], [0], [0, 0, 1, 0], [], []>} : vector<16x16xf32>, vector<16x16xf32>, vector<16x16xf32> -> vector<16x16xf32>
    %cst_88 = arith.constant 2.500000e-01 : f32
    %174 = vector.broadcast %cst_88 : f32 to vector<16x16xf32>
    %175 = arith.mulf %173, %174 : vector<16x16xf32>
    %176 = arith.addf %175, %0 : vector<16x16xf32>
    %cst_89 = arith.constant dense<0xFF800000> : vector<16xf32>
    %177 = vector.multi_reduction <maximumf>, %176, %cst_89 [1] : vector<16x16xf32> to vector<16xf32>
    %178 = vector.shape_cast %177 : vector<16xf32> to vector<16x1xf32>
    %179 = vector.broadcast %178 : vector<16x1xf32> to vector<16x16xf32>
    %180 = arith.subf %176, %179 : vector<16x16xf32>
    %181 = math.exp %180 : vector<16x16xf32>
    %cst_90 = arith.constant dense<0.000000e+00> : vector<16xf32>
    %182 = vector.multi_reduction <add>, %181, %cst_90 [1] : vector<16x16xf32> to vector<16xf32>
    %183 = vector.shape_cast %182 : vector<16xf32> to vector<16x1xf32>
    %184 = tpu.reciprocal %183 {approx = true} : vector<16x1xf32> -> vector<16x1xf32>
    %185 = vector.broadcast %184 : vector<16x1xf32> to vector<16x16xf32>
    %186 = arith.mulf %181, %185 : vector<16x16xf32>
    %cst_91 = arith.constant dense<0.000000e+00> : vector<16x16xf32>
    %187 = tpu.matmul %186, %172, %cst_91 {dimension_numbers = #tpu.dot_dimension_numbers<[1], [0], [0], [1], [0, 0, 1, 1], [], []>} : vector<16x16xf32>, vector<16x16xf32>, vector<16x16xf32> -> vector<16x16xf32>
    %c1_92 = arith.constant 1 : index
    %c0_93 = arith.constant 0 : index
    %c0_94 = arith.constant 0 : index
    %188 = vector.load %arg7[%c1_92, %c0_93, %c0_94] : memref<2x32x32xf32, #tpu.memory_space<vmem>>, vector<1x16x32xf32>
    %189 = vector.shape_cast %188 : vector<1x16x32xf32> to vector<16x32xf32>
    %cst_95 = arith.constant dense<0.000000e+00> : vector<16x32xf32>
    %190 = tpu.matmul %187, %189, %cst_95 {dimension_numbers = #tpu.dot_dimension_numbers<[1], [0], [0], [1], [0, 0, 1, 1], [], []>} : vector<16x16xf32>, vector<16x32xf32>, vector<16x32xf32> -> vector<16x32xf32>
    %191 = vector.broadcast %169 : vector<1x32xf32> to vector<16x32xf32>
    %192 = arith.addf %191, %190 : vector<16x32xf32>
    %193 = vector.extract_strided_slice %167 {offsets = [0, 16], sizes = [16, 16], strides = [1, 1]} : vector<16x96xf32> to vector<16x16xf32>
    %194 = vector.extract_strided_slice %167 {offsets = [0, 48], sizes = [16, 16], strides = [1, 1]} : vector<16x96xf32> to vector<16x16xf32>
    %195 = vector.extract_strided_slice %167 {offsets = [0, 80], sizes = [16, 16], strides = [1, 1]} : vector<16x96xf32> to vector<16x16xf32>
    %cst_96 = arith.constant dense<0.000000e+00> : vector<16x16xf32>
    %196 = tpu.matmul %193, %194, %cst_96 {dimension_numbers = #tpu.dot_dimension_numbers<[1], [1], [0], [0], [0, 0, 1, 0], [], []>} : vector<16x16xf32>, vector<16x16xf32>, vector<16x16xf32> -> vector<16x16xf32>
    %cst_97 = arith.constant 2.500000e-01 : f32
    %197 = vector.broadcast %cst_97 : f32 to vector<16x16xf32>
    %198 = arith.mulf %196, %197 : vector<16x16xf32>
    %199 = arith.addf %198, %0 : vector<16x16xf32>
    %cst_98 = arith.constant dense<0xFF800000> : vector<16xf32>
    %200 = vector.multi_reduction <maximumf>, %199, %cst_98 [1] : vector<16x16xf32> to vector<16xf32>
    %201 = vector.shape_cast %200 : vector<16xf32> to vector<16x1xf32>
    %202 = vector.broadcast %201 : vector<16x1xf32> to vector<16x16xf32>
    %203 = arith.subf %199, %202 : vector<16x16xf32>
    %204 = math.exp %203 : vector<16x16xf32>
    %cst_99 = arith.constant dense<0.000000e+00> : vector<16xf32>
    %205 = vector.multi_reduction <add>, %204, %cst_99 [1] : vector<16x16xf32> to vector<16xf32>
    %206 = vector.shape_cast %205 : vector<16xf32> to vector<16x1xf32>
    %207 = tpu.reciprocal %206 {approx = true} : vector<16x1xf32> -> vector<16x1xf32>
    %208 = vector.broadcast %207 : vector<16x1xf32> to vector<16x16xf32>
    %209 = arith.mulf %204, %208 : vector<16x16xf32>
    %cst_100 = arith.constant dense<0.000000e+00> : vector<16x16xf32>
    %210 = tpu.matmul %209, %195, %cst_100 {dimension_numbers = #tpu.dot_dimension_numbers<[1], [0], [0], [1], [0, 0, 1, 1], [], []>} : vector<16x16xf32>, vector<16x16xf32>, vector<16x16xf32> -> vector<16x16xf32>
    %c1_101 = arith.constant 1 : index
    %c16_102 = arith.constant 16 : index
    %c0_103 = arith.constant 0 : index
    %211 = vector.load %arg7[%c1_101, %c16_102, %c0_103] : memref<2x32x32xf32, #tpu.memory_space<vmem>>, vector<1x16x32xf32>
    %212 = vector.shape_cast %211 : vector<1x16x32xf32> to vector<16x32xf32>
    %cst_104 = arith.constant dense<0.000000e+00> : vector<16x32xf32>
    %213 = tpu.matmul %210, %212, %cst_104 {dimension_numbers = #tpu.dot_dimension_numbers<[1], [0], [0], [1], [0, 0, 1, 1], [], []>} : vector<16x16xf32>, vector<16x32xf32>, vector<16x32xf32> -> vector<16x32xf32>
    %214 = arith.addf %192, %213 : vector<16x32xf32>
    %215 = arith.addf %214, %160 : vector<16x32xf32>
    %c1_105 = arith.constant 1 : index
    %c0_106 = arith.constant 0 : index
    %c0_107 = arith.constant 0 : index
    %216 = vector.load %arg9[%c1_105, %c0_106, %c0_107] : memref<2x1x32xf32, #tpu.memory_space<vmem>>, vector<1x1x32xf32>
    %217 = vector.shape_cast %216 : vector<1x1x32xf32> to vector<1x32xf32>
    %c1_108 = arith.constant 1 : index
    %c0_109 = arith.constant 0 : index
    %c0_110 = arith.constant 0 : index
    %218 = vector.load %arg10[%c1_108, %c0_109, %c0_110] : memref<2x1x32xf32, #tpu.memory_space<vmem>>, vector<1x1x32xf32>
    %219 = vector.shape_cast %218 : vector<1x1x32xf32> to vector<1x32xf32>
    %cst_111 = arith.constant dense<0.000000e+00> : vector<16xf32>
    %220 = vector.multi_reduction <add>, %215, %cst_111 [1] : vector<16x32xf32> to vector<16xf32>
    %221 = vector.shape_cast %220 : vector<16xf32> to vector<16x1xf32>
    %cst_112 = arith.constant 3.200000e+01 : f32
    %222 = vector.broadcast %cst_112 : f32 to vector<16x1xf32>
    %223 = arith.divf %221, %222 : vector<16x1xf32>
    %224 = vector.broadcast %223 : vector<16x1xf32> to vector<16x32xf32>
    %225 = arith.subf %215, %224 : vector<16x32xf32>
    %226 = arith.mulf %225, %225 : vector<16x32xf32>
    %cst_113 = arith.constant dense<0.000000e+00> : vector<16xf32>
    %227 = vector.multi_reduction <add>, %226, %cst_113 [1] : vector<16x32xf32> to vector<16xf32>
    %228 = vector.shape_cast %227 : vector<16xf32> to vector<16x1xf32>
    %cst_114 = arith.constant 3.200000e+01 : f32
    %229 = vector.broadcast %cst_114 : f32 to vector<16x1xf32>
    %230 = arith.divf %228, %229 : vector<16x1xf32>
    %231 = vector.broadcast %223 : vector<16x1xf32> to vector<16x32xf32>
    %232 = arith.subf %215, %231 : vector<16x32xf32>
    %cst_115 = arith.constant 9.99999996E-13 : f32
    %233 = vector.broadcast %cst_115 : f32 to vector<16x1xf32>
    %234 = arith.addf %230, %233 : vector<16x1xf32>
    %235 = math.rsqrt %234 : vector<16x1xf32>
    %236 = vector.broadcast %235 : vector<16x1xf32> to vector<16x32xf32>
    %237 = arith.mulf %232, %236 : vector<16x32xf32>
    %238 = vector.broadcast %217 : vector<1x32xf32> to vector<16x32xf32>
    %239 = arith.mulf %237, %238 : vector<16x32xf32>
    %240 = vector.broadcast %219 : vector<1x32xf32> to vector<16x32xf32>
    %241 = arith.addf %239, %240 : vector<16x32xf32>
    %c1_116 = arith.constant 1 : index
    %c0_117 = arith.constant 0 : index
    %c0_118 = arith.constant 0 : index
    %242 = vector.load %arg11[%c1_116, %c0_117, %c0_118] : memref<2x32x64xf32, #tpu.memory_space<vmem>>, vector<1x32x64xf32>
    %243 = vector.shape_cast %242 : vector<1x32x64xf32> to vector<32x64xf32>
    %cst_119 = arith.constant dense<0.000000e+00> : vector<16x64xf32>
    %244 = tpu.matmul %241, %243, %cst_119 {dimension_numbers = #tpu.dot_dimension_numbers<[1], [0], [0], [1], [0, 0, 1, 1], [], []>} : vector<16x32xf32>, vector<32x64xf32>, vector<16x64xf32> -> vector<16x64xf32>
    %c1_120 = arith.constant 1 : index
    %c0_121 = arith.constant 0 : index
    %c0_122 = arith.constant 0 : index
    %245 = vector.load %arg12[%c1_120, %c0_121, %c0_122] : memref<2x1x64xf32, #tpu.memory_space<vmem>>, vector<1x1x64xf32>
    %246 = vector.shape_cast %245 : vector<1x1x64xf32> to vector<1x64xf32>
    %247 = vector.broadcast %246 : vector<1x64xf32> to vector<16x64xf32>
    %248 = arith.addf %244, %247 : vector<16x64xf32>
    %cst_123 = arith.constant 5.000000e-01 : f32
    %249 = vector.broadcast %cst_123 : f32 to vector<16x64xf32>
    %250 = arith.mulf %249, %248 : vector<16x64xf32>
    %cst_124 = arith.constant 4.471500e-02 : f32
    %251 = vector.broadcast %cst_124 : f32 to vector<16x64xf32>
    %252 = arith.mulf %251, %248 : vector<16x64xf32>
    %253 = arith.mulf %252, %248 : vector<16x64xf32>
    %254 = arith.mulf %253, %248 : vector<16x64xf32>
    %255 = arith.addf %248, %254 : vector<16x64xf32>
    %cst_125 = arith.constant 0.797884583 : f32
    %256 = vector.broadcast %cst_125 : f32 to vector<16x64xf32>
    %257 = arith.mulf %256, %255 : vector<16x64xf32>
    %258 = math.tanh %257 : vector<16x64xf32>
    %cst_126 = arith.constant 1.000000e+00 : f32
    %259 = vector.broadcast %cst_126 : f32 to vector<16x64xf32>
    %260 = arith.addf %259, %258 : vector<16x64xf32>
    %261 = arith.mulf %250, %260 : vector<16x64xf32>
    %c1_127 = arith.constant 1 : index
    %c0_128 = arith.constant 0 : index
    %c0_129 = arith.constant 0 : index
    %262 = vector.load %arg13[%c1_127, %c0_128, %c0_129] : memref<2x64x32xf32, #tpu.memory_space<vmem>>, vector<1x64x32xf32>
    %263 = vector.shape_cast %262 : vector<1x64x32xf32> to vector<64x32xf32>
    %cst_130 = arith.constant dense<0.000000e+00> : vector<16x32xf32>
    %264 = tpu.matmul %261, %263, %cst_130 {dimension_numbers = #tpu.dot_dimension_numbers<[1], [0], [0], [1], [0, 0, 1, 1], [], []>} : vector<16x64xf32>, vector<64x32xf32>, vector<16x32xf32> -> vector<16x32xf32>
    %c1_131 = arith.constant 1 : index
    %c0_132 = arith.constant 0 : index
    %c0_133 = arith.constant 0 : index
    %265 = vector.load %arg14[%c1_131, %c0_132, %c0_133] : memref<2x1x32xf32, #tpu.memory_space<vmem>>, vector<1x1x32xf32>
    %266 = vector.shape_cast %265 : vector<1x1x32xf32> to vector<1x32xf32>
    %267 = vector.broadcast %266 : vector<1x32xf32> to vector<16x32xf32>
    %268 = arith.addf %264, %267 : vector<16x32xf32>
    %269 = arith.addf %268, %241 : vector<16x32xf32>
    %c1_134 = arith.constant 1 : index
    %c0_135 = arith.constant 0 : index
    %c0_136 = arith.constant 0 : index
    %270 = vector.load %arg15[%c1_134, %c0_135, %c0_136] : memref<2x1x32xf32, #tpu.memory_space<vmem>>, vector<1x1x32xf32>
    %271 = vector.shape_cast %270 : vector<1x1x32xf32> to vector<1x32xf32>
    %c1_137 = arith.constant 1 : index
    %c0_138 = arith.constant 0 : index
    %c0_139 = arith.constant 0 : index
    %272 = vector.load %arg16[%c1_137, %c0_138, %c0_139] : memref<2x1x32xf32, #tpu.memory_space<vmem>>, vector<1x1x32xf32>
    %273 = vector.shape_cast %272 : vector<1x1x32xf32> to vector<1x32xf32>
    %cst_140 = arith.constant dense<0.000000e+00> : vector<16xf32>
    %274 = vector.multi_reduction <add>, %269, %cst_140 [1] : vector<16x32xf32> to vector<16xf32>
    %275 = vector.shape_cast %274 : vector<16xf32> to vector<16x1xf32>
    %cst_141 = arith.constant 3.200000e+01 : f32
    %276 = vector.broadcast %cst_141 : f32 to vector<16x1xf32>
    %277 = arith.divf %275, %276 : vector<16x1xf32>
    %278 = vector.broadcast %277 : vector<16x1xf32> to vector<16x32xf32>
    %279 = arith.subf %269, %278 : vector<16x32xf32>
    %280 = arith.mulf %279, %279 : vector<16x32xf32>
    %cst_142 = arith.constant dense<0.000000e+00> : vector<16xf32>
    %281 = vector.multi_reduction <add>, %280, %cst_142 [1] : vector<16x32xf32> to vector<16xf32>
    %282 = vector.shape_cast %281 : vector<16xf32> to vector<16x1xf32>
    %cst_143 = arith.constant 3.200000e+01 : f32
    %283 = vector.broadcast %cst_143 : f32 to vector<16x1xf32>
    %284 = arith.divf %282, %283 : vector<16x1xf32>
    %285 = vector.broadcast %277 : vector<16x1xf32> to vector<16x32xf32>
    %286 = arith.subf %269, %285 : vector<16x32xf32>
    %cst_144 = arith.constant 9.99999996E-13 : f32
    %287 = vector.broadcast %cst_144 : f32 to vector<16x1xf32>
    %288 = arith.addf %284, %287 : vector<16x1xf32>
    %289 = math.rsqrt %288 : vector<16x1xf32>
    %290 = vector.broadcast %289 : vector<16x1xf32> to vector<16x32xf32>
    %291 = arith.mulf %286, %290 : vector<16x32xf32>
    %292 = vector.broadcast %271 : vector<1x32xf32> to vector<16x32xf32>
    %293 = arith.mulf %291, %292 : vector<16x32xf32>
    %294 = vector.broadcast %273 : vector<1x32xf32> to vector<16x32xf32>
    %295 = arith.addf %293, %294 : vector<16x32xf32>
    %296 = vector.extract_strided_slice %295 {offsets = [0, 0], sizes = [1, 32], strides = [1, 1]} : vector<16x32xf32> to vector<1x32xf32>
    %297 = vector.extract_strided_slice %295 {offsets = [8, 0], sizes = [1, 32], strides = [1, 1]} : vector<16x32xf32> to vector<1x32xf32>
    %298 = tpu.concatenate %296, %297 in 0 : vector<1x32xf32>, vector<1x32xf32> -> vector<2x32xf32>
    %c0_145 = arith.constant 0 : index
    %c0_146 = arith.constant 0 : index
    %299 = vector.load %arg19[%c0_145, %c0_146] : memref<2x32xf32, #tpu.memory_space<vmem>>, vector<2x32xf32>
    tpu.vector_store %arg19[%c0_145, %c0_146], %298 {strides = array<i32>} : memref<2x32xf32, #tpu.memory_space<vmem>>, vector<2x32xf32>,
    return
  }
}

</mosaic_0001>

<llo_original>
// kernel: eq.15
$region0: #{eq.15}
  %s0 = inlined_call_operand.vmem [shape: s32[2,8], index: 0, kind: input, shape index: {}]
  %s1 = inlined_call_operand.vmem [shape: s32[16], index: 1, kind: output, shape index: {}]
  $region1: #{eq.15} parent=0
    #allocation0 [shape = 'u8[4096]{0}', space=vmem, size = 0x1000, scoped, tag = 'scoped mem for output reshape']
    #allocation1 [shape = 'u8[4096]{0}', space=vmem, size = 0x1000, scoped, tag = 'scoped mem for input reshape']
    %s3 = sshllo.u32 0, 2
    %v4 = vld [vmem:[%s0] sm:%s3]
    %5 = vst [vmem:[#allocation1] sm:%s3] %v4
    %v6 = vld [vmem:[#allocation1] sm:$0x1]
    %vm7 = vcmask 64512
    %8 = vst.msk [vmem:[#allocation0] sm:$0x1] %vm7, %v6
    %s9 = scalar_lea.vmem [#allocation1], 1
    %v10 = vld [vmem:[%s9] sm:$0x1]
    %11 = vrot.lane.b32.xlu0 %v10, 8
    %v12 = vpop.permute.xlu0 %11
    %vm13 = vcmask 130112
    %14 = vst.msk [vmem:[#allocation0] sm:$0x1] %vm13, %v12
    %s16 = sshllo.u32 0, 1
    %v18 = vld [vmem:[#allocation0] sm:%s16]
    %s19 = sshllo.u32 0, 1
    %20 = vst [vmem:[%s1] sm:%s19] %v18

// kernel: mul.5
$region0: #{mul.5}
  %s0 = inlined_call_operand.vmem [shape: f32[2,8], index: 0, kind: input, shape index: {}]
  %s1 = inlined_call_operand.vmem [shape: f32[16], index: 1, kind: output, shape index: {}]
  $region1: #{mul.5} parent=0
    #allocation0 [shape = 'u8[4096]{0}', space=vmem, size = 0x1000, scoped, tag = 'scoped mem for output reshape']
    #allocation1 [shape = 'u8[4096]{0}', space=vmem, size = 0x1000, scoped, tag = 'scoped mem for input reshape']
    %s3 = sshllo.u32 0, 2
    %v4 = vld [vmem:[%s0] sm:%s3]
    %5 = vst [vmem:[#allocation1] sm:%s3] %v4
    %v6 = vld [vmem:[#allocation1] sm:$0x1]
    %vm7 = vcmask 64512
    %8 = vst.msk [vmem:[#allocation0] sm:$0x1] %vm7, %v6
    %s9 = scalar_lea.vmem [#allocation1], 1
    %v10 = vld [vmem:[%s9] sm:$0x1]
    %11 = vrot.lane.b32.xlu0 %v10, 8
    %v12 = vpop.permute.xlu0 %11
    %vm13 = vcmask 130112
    %14 = vst.msk [vmem:[#allocation0] sm:$0x1] %vm13, %v12
    %s16 = sshllo.u32 0, 1
    %v18 = vld [vmem:[#allocation0] sm:%s16]
    %s19 = sshllo.u32 0, 1
    %20 = vst [vmem:[%s1] sm:%s19] %v18

// kernel: simcse_forward.1
$region0: #{simcse_forward.1}
  #allocation0 [shape = 'u32[]', space=smem, size = 0x4, offset = 0x4, fixed_abs, tag = 'smem constant byte address 0x4 - core index']
  #allocation1 [shape = 'u32[144,128]{1,0:T(1,128)}', space=vmem, size = 0x12000, scoped, tag = 'internal scratch']
  %s0 = inlined_call_operand.vmem [shape: f32[16,32], index: 0, kind: input, shape index: {}]
  %s1 = inlined_call_operand.vmem [shape: f32[16,16], index: 1, kind: input, shape index: {}]
  %s2 = inlined_call_operand.vmem [shape: f32[2,16], index: 2, kind: input, shape index: {}]
  %s3 = inlined_call_operand.vmem [shape: f32[1,32], index: 3, kind: input, shape index: {}]
  %s4 = inlined_call_operand.vmem [shape: f32[1,32], index: 4, kind: input, shape index: {}]
  %s5 = inlined_call_operand.vmem [shape: f32[2,32,96], index: 5, kind: input, shape index: {}]
  %s6 = inlined_call_operand.vmem [shape: f32[2,1,96], index: 6, kind: input, shape index: {}]
  %s7 = inlined_call_operand.vmem [shape: f32[2,32,32], index: 7, kind: input, shape index: {}]
  %s8 = inlined_call_operand.vmem [shape: f32[2,1,32], index: 8, kind: input, shape index: {}]
  %s9 = inlined_call_operand.vmem [shape: f32[2,1,32], index: 9, kind: input, shape index: {}]
  %s10 = inlined_call_operand.vmem [shape: f32[2,1,32], index: 10, kind: input, shape index: {}]
  %s11 = inlined_call_operand.vmem [shape: f32[2,32,64], index: 11, kind: input, shape index: {}]
  %s12 = inlined_call_operand.vmem [shape: f32[2,1,64], index: 12, kind: input, shape index: {}]
  %s13 = inlined_call_operand.vmem [shape: f32[2,64,32], index: 13, kind: input, shape index: {}]
  %s14 = inlined_call_operand.vmem [shape: f32[2,1,32], index: 14, kind: input, shape index: {}]
  %s15 = inlined_call_operand.vmem [shape: f32[2,1,32], index: 15, kind: input, shape index: {}]
  %s16 = inlined_call_operand.vmem [shape: f32[2,1,32], index: 16, kind: input, shape index: {}]
  %s17 = inlined_call_operand.vmem [shape: f32[32,32], index: 17, kind: input, shape index: {}]
  %s18 = inlined_call_operand.vmem [shape: f32[1,32], index: 18, kind: input, shape index: {}]
  %s19 = inlined_call_operand.hbm [shape: f32[2,32], index: 19, kind: output, shape index: {}]
  %s20 = sld [smem:[#allocation0]]
  $region86: #{simcse_forward.1} parent=0
    _
  %s22 = ssub.s32 1, %s20
  %s23 = scalar_select 0, %s22, %s20
  $region1: #{simcse_forward.1} parent=0
    #allocation2 [shape = 'u8[1024]{0}', space=vmem, size = 0x400, scoped, tag = 'output window, operand 0, single buffered']
    #allocation3 [shape = 's32[1]{0}', space=sflag, size = 0x4, scoped, tag = 'scoped memory for simcse_forward.1']
    %24 = vsyncpa [#allocation3], 0
    // Predicated region
    $region2: #{simcse_forward.1} parent=1 // pred_check
      _
    $region3: #{simcse_forward.1} parent=1 // pred_check_branch
      %26 = sbr.rel (0) target = $region5
    $region4: #{simcse_forward.1} parent=1 // pred_region
      _
    $region5: #{simcse_forward.1} parent=1 // pred_fallthru
      _
    // Predicated region
    $region6: #{simcse_forward.1} parent=1 // pred_check
      _
    $region7: #{simcse_forward.1} parent=1 // pred_check_branch
      %28 = sbr.rel (0) target = $region9
    $region8: #{simcse_forward.1} parent=1 // pred_region
      _
    $region9: #{simcse_forward.1} parent=1 // pred_fallthru
      _
    // Predicated region
    $region10: #{simcse_forward.1} parent=1 // pred_check
      _
    $region11: #{simcse_forward.1} parent=1 // pred_check_branch
      %30 = sbr.rel (0) target = $region13
    $region12: #{simcse_forward.1} parent=1 // pred_region
      _
    $region13: #{simcse_forward.1} parent=1 // pred_fallthru
      _
    // Predicated region
    $region14: #{simcse_forward.1} parent=1 // pred_check
      _
    $region15: #{simcse_forward.1} parent=1 // pred_check_branch
      %32 = sbr.rel (0) target = $region17
    $region16: #{simcse_forward.1} parent=1 // pred_region
      _
    $region17: #{simcse_forward.1} parent=1 // pred_fallthru
      _
    // Predicated region
    $region18: #{simcse_forward.1} parent=1 // pred_check
      _
    $region19: #{simcse_forward.1} parent=1 // pred_check_branch
      %34 = sbr.rel (0) target = $region21
    $region20: #{simcse_forward.1} parent=1 // pred_region
      _
    $region21: #{simcse_forward.1} parent=1 // pred_fallthru
      _
    // Predicated region
    $region22: #{simcse_forward.1} parent=1 // pred_check
      _
    $region23: #{simcse_forward.1} parent=1 // pred_check_branch
      %36 = sbr.rel (0) target = $region25
    $region24: #{simcse_forward.1} parent=1 // pred_region
      _
    $region25: #{simcse_forward.1} parent=1 // pred_fallthru
      _
    // Predicated region
    $region26: #{simcse_forward.1} parent=1 // pred_check
      _
    $region27: #{simcse_forward.1} parent=1 // pred_check_branch
      %38 = sbr.rel (0) target = $region29
    $region28: #{simcse_forward.1} parent=1 // pred_region
      _
    $region29: #{simcse_forward.1} parent=1 // pred_fallthru
      _
    // Predicated region
    $region30: #{simcse_forward.1} parent=1 // pred_check
      _
    $region31: #{simcse_forward.1} parent=1 // pred_check_branch
      %40 = sbr.rel (0) target = $region33
    $region32: #{simcse_forward.1} parent=1 // pred_region
      _
    $region33: #{simcse_forward.1} parent=1 // pred_fallthru
      _
    // Predicated region
    $region34: #{simcse_forward.1} parent=1 // pred_check
      _
    $region35: #{simcse_forward.1} parent=1 // pred_check_branch
      %42 = sbr.rel (0) target = $region37
    $region36: #{simcse_forward.1} parent=1 // pred_region
      _
    $region37: #{simcse_forward.1} parent=1 // pred_fallthru
      _
    // Predicated region
    $region38: #{simcse_forward.1} parent=1 // pred_check
      _
    $region39: #{simcse_forward.1} parent=1 // pred_check_branch
      %44 = sbr.rel (0) target = $region41
    $region40: #{simcse_forward.1} parent=1 // pred_region
      _
    $region41: #{simcse_forward.1} parent=1 // pred_fallthru
      _
    // Predicated region
    $region42: #{simcse_forward.1} parent=1 // pred_check
      _
    $region43: #{simcse_forward.1} parent=1 // pred_check_branch
      %46 = sbr.rel (0) target = $region45
    $region44: #{simcse_forward.1} parent=1 // pred_region
      _
    $region45: #{simcse_forward.1} parent=1 // pred_fallthru
      _
    // Predicated region
    $region46: #{simcse_forward.1} parent=1 // pred_check
      _
    $region47: #{simcse_forward.1} parent=1 // pred_check_branch
      %48 = sbr.rel (0) target = $region49
    $region48: #{simcse_forward.1} parent=1 // pred_region
      _
    $region49: #{simcse_forward.1} parent=1 // pred_fallthru
      _
    // Predicated region
    $region50: #{simcse_forward.1} parent=1 // pred_check
      _
    $region51: #{simcse_forward.1} parent=1 // pred_check_branch
      %50 = sbr.rel (0) target = $region53
    $region52: #{simcse_forward.1} parent=1 // pred_region
      _
    $region53: #{simcse_forward.1} parent=1 // pred_fallthru
      _
    // Predicated region
    $region54: #{simcse_forward.1} parent=1 // pred_check
      _
    $region55: #{simcse_forward.1} parent=1 // pred_check_branch
      %52 = sbr.rel (0) target = $region57
    $region56: #{simcse_forward.1} parent=1 // pred_region
      _
    $region57: #{simcse_forward.1} parent=1 // pred_fallthru
      _
    // Predicated region
    $region58: #{simcse_forward.1} parent=1 // pred_check
      _
    $region59: #{simcse_forward.1} parent=1 // pred_check_branch
      %54 = sbr.rel (0) target = $region61
    $region60: #{simcse_forward.1} parent=1 // pred_region
      _
    $region61: #{simcse_forward.1} parent=1 // pred_fallthru
      _
    // Predicated region
    $region62: #{simcse_forward.1} parent=1 // pred_check
      _
    $region63: #{simcse_forward.1} parent=1 // pred_check_branch
      %56 = sbr.rel (0) target = $region65
    $region64: #{simcse_forward.1} parent=1 // pred_region
      _
    $region65: #{simcse_forward.1} parent=1 // pred_fallthru
      _
    // Predicated region
    $region66: #{simcse_forward.1} parent=1 // pred_check
      _
    $region67: #{simcse_forward.1} parent=1 // pred_check_branch
      %58 = sbr.rel (0) target = $region69
    $region68: #{simcse_forward.1} parent=1 // pred_region
      _
    $region69: #{simcse_forward.1} parent=1 // pred_fallthru
      _
    // Predicated region
    $region70: #{simcse_forward.1} parent=1 // pred_check
      _
    $region71: #{simcse_forward.1} parent=1 // pred_check_branch
      %60 = sbr.rel (0) target = $region73
    $region72: #{simcse_forward.1} parent=1 // pred_region
      _
    $region73: #{simcse_forward.1} parent=1 // pred_fallthru
      _
    // Predicated region
    $region74: #{simcse_forward.1} parent=1 // pred_check
      _
    $region75: #{simcse_forward.1} parent=1 // pred_check_branch
      %62 = sbr.rel (0) target = $region77
    $region76: #{simcse_forward.1} parent=1 // pred_region
      _
    $region77: #{simcse_forward.1} parent=1 // pred_fallthru
      _
    %v63 = vld [vmem:[%s1] sm:$0xff]
    %v64 = vld [vmem:[%s1 + $0x8] sm:$0xff]
    %v65 = vld [vmem:[%s0] sm:$0xff]
    %v66 = vld [vmem:[%s0 + $0x8] sm:$0xff]
    %v67 = vld [vmem:[%s3] sm:$0x1]
    %v68 = vld [vmem:[%s4] sm:$0x1]
    %vm69 = vcmask 261120
    %v70 = vsel %vm69, %v65, 0.0
    %71 = vadd.xlane.f32.xlu0 %v70
    %v72 = vpop.xlane.xlu0 %71
    %v73 = vsel %vm69, %v66, 0.0
    %74 = vadd.xlane.f32.xlu0 %v73
    %v75 = vpop.xlane.xlu0 %74
    %v76 = vrcp.pop 32.0
    %v77 = vmul.f32 %v72, %v76
    %v78 = vmul.f32 %v75, %v76
    %v79 = vsub.f32 %v65, %v77
    %v80 = vsub.f32 %v66, %v78
    %v81 = vmul.f32 %v79, %v79
    %v82 = vmul.f32 %v80, %v80
    %v83 = vsel %vm69, %v81, 0.0
    %84 = vadd.xlane.f32.xlu0 %v83
    %v85 = vpop.xlane.xlu0 %84
    %v86 = vsel %vm69, %v82, 0.0
    %87 = vadd.xlane.f32.xlu0 %v86
    %v88 = vpop.xlane.xlu0 %87
    %v89 = vmul.f32 %v85, %v76
    %v90 = vmul.f32 %v88, %v76
    %v91 = vadd.f32 %v89, 1e-12
    %v92 = vadd.f32 %v90, 1e-12
    %v93 = vrsqrt.pop %v91
    %v94 = vrsqrt.pop %v92
    %v95 = vmul.f32 %v79, %v93
    %v96 = vmul.f32 %v80, %v94
    %v98 = vlaneseq
    %v99 = vshrl.u32 %v98, 7
    %v100 = vsub.s32 0, %v99
    %v101 = vrot.slane %v67, %v100
    %v103 = vmul.f32 %v95, %v101
    %v104 = vmul.f32 %v96, %v101
    %v106 = vlaneseq
    %v107 = vshrl.u32 %v106, 7
    %v108 = vsub.s32 0, %v107
    %v109 = vrot.slane %v68, %v108
    %v111 = vadd.f32 %v103, %v109
    %v112 = vadd.f32 %v104, %v109
    %v113 = vld [vmem:[%s5] sm:$0xff]
    %v114 = vld [vmem:[%s5 + $0x8] sm:$0xff]
    %v115 = vld [vmem:[%s5 + $0x10] sm:$0xff]
    %v116 = vld [vmem:[%s5 + $0x18] sm:$0xff]
    %v117 = vld [vmem:[%s6] sm:$0x1]
    %v119 = vlaneseq
    %v120 = vshrl.u32 %v119, 7
    %v121 = vsub.s32 0, %v120
    %v122 = vrot.slane %v117, %v121
    %v125 = vsel %vm69, %v111, 0
    %v128 = vsel %vm69, %v112, 0
    %130 = vmatprep.subr.mxu0 0.0
    %131 = vmatpush1.msra.mxu0 %v113
    %132 = vmatprep.subr.mxu0 0.0
    %133 = vmatpush1.msra.mxu0 %v114
    %134 = vmatprep.subr.mxu0 0.0
    %135 = vmatpush1.msra.mxu0 %v115
    %136 = vmatprep.subr.mxu0 0.0
    %137 = vmatpush1.msra.mxu0 %v116
    %138 = vmatprep.subr.mxu0 0.0
    %139 = vmatpush1.msra.mxu0 0.0
    %140 = vmatprep.subr.mxu0 0.0
    %141 = vmatpush1.msra.mxu0 0.0
    %142 = vmatprep.subr.mxu0 0.0
    %143 = vmatpush1.msra.mxu0 0.0
    %144 = vmatprep.subr.mxu0 0.0
    %145 = vmatpush1.msra.mxu0 0.0
    %146 = vmatprep.subr.mxu0 0.0
    %147 = vmatpush1.msra.mxu0 0.0
    %148 = vmatprep.subr.mxu0 0.0
    %149 = vmatpush1.msra.mxu0 0.0
    %150 = vmatprep.subr.mxu0 0.0
    %151 = vmatpush1.msra.mxu0 0.0
    %152 = vmatprep.subr.mxu0 0.0
    %153 = vmatpush1.msra.mxu0 0.0
    %154 = vmatprep.subr.mxu0 0.0
    %155 = vmatpush1.msra.mxu0 0.0
    %156 = vmatprep.subr.mxu0 0.0
    %157 = vmatpush1.msra.mxu0 0.0
    %158 = vmatprep.subr.mxu0 0.0
    %159 = vmatpush1.msra.mxu0 0.0
    %160 = vmatprep.subr.mxu0 0.0
    %161 = vmatpush1.msra.mxu0 0.0
    %162 = vmatprep.subr.mxu0 0.0
    %163 = vmatpush1.msra.mxu0 0.0
    %164 = vmatprep.subr.mxu0 0.0
    %165 = vmatpush1.msra.mxu0 0.0
    %166 = vmatprep.subr.mxu0 0.0
    %167 = vmatpush1.msra.mxu0 0.0
    %168 = vmatprep.subr.mxu0 0.0
    %169 = vmatpush1.msra.mxu0 0.0
    %170 = vmatprep.subr.mxu0 0.0
    %171 = vmatpush1.msra.mxu0 0.0
    %172 = vmatprep.subr.mxu0 0.0
    %173 = vmatpush1.msra.mxu0 0.0
    %174 = vmatprep.subr.mxu0 0.0
    %175 = vmatpush1.msra.mxu0 0.0
    %176 = vmatprep.subr.mxu0 0.0
    %177 = vmatpush1.msra.mxu0 0.0
    %178 = vmatprep.subr.mxu0 0.0
    %179 = vmatpush1.msra.mxu0 0.0
    %180 = vmatprep.subr.mxu0 0.0
    %181 = vmatpush1.msra.mxu0 0.0
    %182 = vmatprep.subr.mxu0 0.0
    %183 = vmatpush1.msra.mxu0 0.0
    %184 = vmatprep.subr.mxu0 0.0
    %185 = vmatpush1.msra.mxu0 0.0
    %186 = vmatprep.subr.mxu0 0.0
    %187 = vmatpush1.msra.mxu0 0.0
    %188 = vmatprep.subr.mxu0 0.0
    %189 = vmatpush1.msra.mxu0 0.0
    %190 = vmatprep.subr.mxu0 0.0
    %191 = vmatpush1.msra.mxu0 0.0
    %192 = vmatprep.subr.mxu0 0.0
    %193 = vmatpush1.msra.mxu0 0.0
    %194 = vmatprep.mubr.f32.mxu0 0.0
    %195 = vmatmul.mubr.f32.gmra.mrb[0].mxu0 %v125
    %v196 = vpop.f32.mrb[0].mxu0
    %v197 = vadd.f32 %v122, %v196
    %v198 = vpop.f32.mrb[0].mxu0
    %199 = vmatprep.mubr.f32.mxu0 0.0
    %200 = vmatmul.mubr.f32.gmra.mrb[0].mxu0 %v128
    %v201 = vpop.f32.mrb[0].mxu0
    %v202 = vadd.f32 %v122, %v201
    %v203 = vpop.f32.mrb[0].mxu0
    %204 = vdwg.mxu0
    %v205 = vld [vmem:[%s8] sm:$0x1]
    %208 = vrot.lane.b32.xlu0 %v197, 96
    %v209 = vpop.permute.xlu0 %208
    %210 = vrot.lane.b32.xlu0 %v202, 96
    %v211 = vpop.permute.xlu0 %210
    %vm212 = vcmask 130048
    %v213 = vsel %vm212, %v197, 0
    %v215 = vsel %vm212, %v202, 0
    %v217 = vsel %vm212, %v209, 0
    %v219 = vsel %vm212, %v211, 0
    %221 = vmatprep.subr.mxu0 0.0
    %222 = vmatpush1.xpose.msra.mxu0 %v217
    %223 = vmatprep.subr.mxu0 0.0
    %224 = vmatpush1.xpose.msra.mxu0 %v219
    %225 = vmatprep.subr.mxu0 0.0
    %226 = vmatpush1.xpose.msra.mxu0 0.0
    %227 = vmatprep.subr.mxu0 0.0
    %228 = vmatpush1.xpose.msra.mxu0 0.0
    %229 = vmatprep.subr.mxu0 0.0
    %230 = vmatpush1.xpose.msra.mxu0 0.0
    %231 = vmatprep.subr.mxu0 0.0
    %232 = vmatpush1.xpose.msra.mxu0 0.0
    %233 = vmatprep.subr.mxu0 0.0
    %234 = vmatpush1.xpose.msra.mxu0 0.0
    %235 = vmatprep.subr.mxu0 0.0
    %236 = vmatpush1.xpose.msra.mxu0 0.0
    %237 = vmatprep.subr.mxu0 0.0
    %238 = vmatpush1.xpose.msra.mxu0 0.0
    %239 = vmatprep.subr.mxu0 0.0
    %240 = vmatpush1.xpose.msra.mxu0 0.0
    %241 = vmatprep.subr.mxu0 0.0
    %242 = vmatpush1.xpose.msra.mxu0 0.0
    %243 = vmatprep.subr.mxu0 0.0
    %244 = vmatpush1.xpose.msra.mxu0 0.0
    %245 = vmatprep.subr.mxu0 0.0
    %246 = vmatpush1.xpose.msra.mxu0 0.0
    %247 = vmatprep.subr.mxu0 0.0
    %248 = vmatpush1.xpose.msra.mxu0 0.0
    %249 = vmatprep.subr.mxu0 0.0
    %250 = vmatpush1.xpose.msra.mxu0 0.0
    %251 = vmatprep.subr.mxu0 0.0
    %252 = vmatpush1.xpose.msra.mxu0 0.0
    %253 = vmatprep.subr.mxu0 0.0
    %254 = vmatpush1.xpose.msra.mxu0 0.0
    %255 = vmatprep.subr.mxu0 0.0
    %256 = vmatpush1.xpose.msra.mxu0 0.0
    %257 = vmatprep.subr.mxu0 0.0
    %258 = vmatpush1.xpose.msra.mxu0 0.0
    %259 = vmatprep.subr.mxu0 0.0
    %260 = vmatpush1.xpose.msra.mxu0 0.0
    %261 = vmatprep.subr.mxu0 0.0
    %262 = vmatpush1.xpose.msra.mxu0 0.0
    %263 = vmatprep.subr.mxu0 0.0
    %264 = vmatpush1.xpose.msra.mxu0 0.0
    %265 = vmatprep.subr.mxu0 0.0
    %266 = vmatpush1.xpose.msra.mxu0 0.0
    %267 = vmatprep.subr.mxu0 0.0
    %268 = vmatpush1.xpose.msra.mxu0 0.0
    %269 = vmatprep.subr.mxu0 0.0
    %270 = vmatpush1.xpose.msra.mxu0 0.0
    %271 = vmatprep.subr.mxu0 0.0
    %272 = vmatpush1.xpose.msra.mxu0 0.0
    %273 = vmatprep.subr.mxu0 0.0
    %274 = vmatpush1.xpose.msra.mxu0 0.0
    %275 = vmatprep.subr.mxu0 0.0
    %276 = vmatpush1.xpose.msra.mxu0 0.0
    %277 = vmatprep.subr.mxu0 0.0
    %278 = vmatpush1.xpose.msra.mxu0 0.0
    %279 = vmatprep.subr.mxu0 0.0
    %280 = vmatpush1.xpose.msra.mxu0 0.0
    %281 = vmatprep.subr.mxu0 0.0
    %282 = vmatpush1.xpose.msra.mxu0 0.0
    %283 = vmatprep.subr.mxu0 0.0
    %284 = vmatpush1.xpose.msra.mxu0 0.0
    %285 = vmatprep.mubr.f32.mxu0 0.0
    %286 = vmatmul.mubr.f32.gmra.mrb[0].mxu0 %v213
    %v287 = vpop.f32.mrb[0].mxu0
    %v288 = vadd.f32 0.0, %v287
    %v289 = vpop.f32.mrb[0].mxu0
    %290 = vmatprep.mubr.f32.mxu0 0.0
    %291 = vmatmul.mubr.f32.gmra.mrb[0].mxu0 %v215
    %v292 = vpop.f32.mrb[0].mxu0
    %v293 = vadd.f32 0.0, %v292
    %v294 = vpop.f32.mrb[0].mxu0
    %295 = vdwg.mxu0
    %v296 = vmul.f32 %v288, 0.25
    %v297 = vmul.f32 %v293, 0.25
    %v298 = vadd.f32 %v296, %v63
    %v299 = vadd.f32 %v297, %v64
    %v300 = vsel %vm212, %v298, -inf
    %301 = vmax.xlane.f32.xlu0 %v300
    %v302 = vpop.xlane.xlu0 %301
    %v303 = vsel %vm212, %v299, -inf
    %304 = vmax.xlane.f32.xlu0 %v303
    %v305 = vpop.xlane.xlu0 %304
    %v306 = vsub.f32 %v298, %v302
    %v307 = vsub.f32 %v299, %v305
    %v308 = vmul.f32 %v306, 1.442695
    %v309 = vpow.pop %v308
    %v310 = vmul.f32 %v307, 1.442695
    %v311 = vpow.pop %v310
    %v312 = vsel %vm212, %v309, 0.0
    %313 = vadd.xlane.f32.xlu0 %v312
    %v314 = vpop.xlane.xlu0 %313
    %v315 = vsel %vm212, %v311, 0.0
    %316 = vadd.xlane.f32.xlu0 %v315
    %v317 = vpop.xlane.xlu0 %316
    %v318 = vrcp.pop %v314
    %v319 = vrcp.pop %v317
    %v320 = vmul.f32 %v309, %v318
    %v321 = vmul.f32 %v311, %v319
    %322 = vrot.lane.b32.xlu0 %v197, 64
    %v323 = vpop.permute.xlu0 %322
    %324 = vrot.lane.b32.xlu0 %v202, 64
    %v325 = vpop.permute.xlu0 %324
    %v329 = vsel %vm212, %v320, 0
    %v332 = vsel %vm212, %v321, 0
    %334 = vmatprep.subr.mxu0 0.0
    %335 = vmatpush1.msra.mxu0 %v323
    %336 = vmatprep.subr.mxu0 0.0
    %337 = vmatpush1.msra.mxu0 %v325
    %338 = vmatprep.subr.mxu0 0.0
    %339 = vmatpush1.msra.mxu0 0.0
    %340 = vmatprep.subr.mxu0 0.0
    %341 = vmatpush1.msra.mxu0 0.0
    %342 = vmatprep.subr.mxu0 0.0
    %343 = vmatpush1.msra.mxu0 0.0
    %344 = vmatprep.subr.mxu0 0.0
    %345 = vmatpush1.msra.mxu0 0.0
    %346 = vmatprep.subr.mxu0 0.0
    %347 = vmatpush1.msra.mxu0 0.0
    %348 = vmatprep.subr.mxu0 0.0
    %349 = vmatpush1.msra.mxu0 0.0
    %350 = vmatprep.subr.mxu0 0.0
    %351 = vmatpush1.msra.mxu0 0.0
    %352 = vmatprep.subr.mxu0 0.0
    %353 = vmatpush1.msra.mxu0 0.0
    %354 = vmatprep.subr.mxu0 0.0
    %355 = vmatpush1.msra.mxu0 0.0
    %356 = vmatprep.subr.mxu0 0.0
    %357 = vmatpush1.msra.mxu0 0.0
    %358 = vmatprep.subr.mxu0 0.0
    %359 = vmatpush1.msra.mxu0 0.0
    %360 = vmatprep.subr.mxu0 0.0
    %361 = vmatpush1.msra.mxu0 0.0
    %362 = vmatprep.subr.mxu0 0.0
    %363 = vmatpush1.msra.mxu0 0.0
    %364 = vmatprep.subr.mxu0 0.0
    %365 = vmatpush1.msra.mxu0 0.0
    %366 = vmatprep.subr.mxu0 0.0
    %367 = vmatpush1.msra.mxu0 0.0
    %368 = vmatprep.subr.mxu0 0.0
    %369 = vmatpush1.msra.mxu0 0.0
    %370 = vmatprep.subr.mxu0 0.0
    %371 = vmatpush1.msra.mxu0 0.0
    %372 = vmatprep.subr.mxu0 0.0
    %373 = vmatpush1.msra.mxu0 0.0
    %374 = vmatprep.subr.mxu0 0.0
    %375 = vmatpush1.msra.mxu0 0.0
    %376 = vmatprep.subr.mxu0 0.0
    %377 = vmatpush1.msra.mxu0 0.0
    %378 = vmatprep.subr.mxu0 0.0
    %379 = vmatpush1.msra.mxu0 0.0
    %380 = vmatprep.subr.mxu0 0.0
    %381 = vmatpush1.msra.mxu0 0.0
    %382 = vmatprep.subr.mxu0 0.0
    %383 = vmatpush1.msra.mxu0 0.0
    %384 = vmatprep.subr.mxu0 0.0
    %385 = vmatpush1.msra.mxu0 0.0
    %386 = vmatprep.subr.mxu0 0.0
    %387 = vmatpush1.msra.mxu0 0.0
    %388 = vmatprep.subr.mxu0 0.0
    %389 = vmatpush1.msra.mxu0 0.0
    %390 = vmatprep.subr.mxu0 0.0
    %391 = vmatpush1.msra.mxu0 0.0
    %392 = vmatprep.subr.mxu0 0.0
    %393 = vmatpush1.msra.mxu0 0.0
    %394 = vmatprep.subr.mxu0 0.0
    %395 = vmatpush1.msra.mxu0 0.0
    %396 = vmatprep.subr.mxu0 0.0
    %397 = vmatpush1.msra.mxu0 0.0
    %398 = vmatprep.mubr.f32.mxu0 0.0
    %399 = vmatmul.mubr.f32.gmra.mrb[0].mxu0 %v329
    %v400 = vpop.f32.mrb[0].mxu0
    %v401 = vadd.f32 0.0, %v400
    %v402 = vpop.f32.mrb[0].mxu0
    %403 = vmatprep.mubr.f32.mxu0 0.0
    %404 = vmatmul.mubr.f32.gmra.mrb[0].mxu0 %v332
    %v405 = vpop.f32.mrb[0].mxu0
    %v406 = vadd.f32 0.0, %v405
    %v407 = vpop.f32.mrb[0].mxu0
    %408 = vdwg.mxu0
    %v409 = vld [vmem:[%s7] sm:$0xff]
    %v410 = vld [vmem:[%s7 + $0x8] sm:$0xff]
    %v412 = vsel %vm212, %v401, 0
    %v415 = vsel %vm212, %v406, 0
    %417 = vmatprep.subr.mxu0 0.0
    %418 = vmatpush1.msra.mxu0 %v409
    %419 = vmatprep.subr.mxu0 0.0
    %420 = vmatpush1.msra.mxu0 %v410
    %421 = vmatprep.subr.mxu0 0.0
    %422 = vmatpush1.msra.mxu0 0.0
    %423 = vmatprep.subr.mxu0 0.0
    %424 = vmatpush1.msra.mxu0 0.0
    %425 = vmatprep.subr.mxu0 0.0
    %426 = vmatpush1.msra.mxu0 0.0
    %427 = vmatprep.subr.mxu0 0.0
    %428 = vmatpush1.msra.mxu0 0.0
    %429 = vmatprep.subr.mxu0 0.0
    %430 = vmatpush1.msra.mxu0 0.0
    %431 = vmatprep.subr.mxu0 0.0
    %432 = vmatpush1.msra.mxu0 0.0
    %433 = vmatprep.subr.mxu0 0.0
    %434 = vmatpush1.msra.mxu0 0.0
    %435 = vmatprep.subr.mxu0 0.0
    %436 = vmatpush1.msra.mxu0 0.0
    %437 = vmatprep.subr.mxu0 0.0
    %438 = vmatpush1.msra.mxu0 0.0
    %439 = vmatprep.subr.mxu0 0.0
    %440 = vmatpush1.msra.mxu0 0.0
    %441 = vmatprep.subr.mxu0 0.0
    %442 = vmatpush1.msra.mxu0 0.0
    %443 = vmatprep.subr.mxu0 0.0
    %444 = vmatpush1.msra.mxu0 0.0
    %445 = vmatprep.subr.mxu0 0.0
    %446 = vmatpush1.msra.mxu0 0.0
    %447 = vmatprep.subr.mxu0 0.0
    %448 = vmatpush1.msra.mxu0 0.0
    %449 = vmatprep.subr.mxu0 0.0
    %450 = vmatpush1.msra.mxu0 0.0
    %451 = vmatprep.subr.mxu0 0.0
    %452 = vmatpush1.msra.mxu0 0.0
    %453 = vmatprep.subr.mxu0 0.0
    %454 = vmatpush1.msra.mxu0 0.0
    %455 = vmatprep.subr.mxu0 0.0
    %456 = vmatpush1.msra.mxu0 0.0
    %457 = vmatprep.subr.mxu0 0.0
    %458 = vmatpush1.msra.mxu0 0.0
    %459 = vmatprep.subr.mxu0 0.0
    %460 = vmatpush1.msra.mxu0 0.0
    %461 = vmatprep.subr.mxu0 0.0
    %462 = vmatpush1.msra.mxu0 0.0
    %463 = vmatprep.subr.mxu0 0.0
    %464 = vmatpush1.msra.mxu0 0.0
    %465 = vmatprep.subr.mxu0 0.0
    %466 = vmatpush1.msra.mxu0 0.0
    %467 = vmatprep.subr.mxu0 0.0
    %468 = vmatpush1.msra.mxu0 0.0
    %469 = vmatprep.subr.mxu0 0.0
    %470 = vmatpush1.msra.mxu0 0.0
    %471 = vmatprep.subr.mxu0 0.0
    %472 = vmatpush1.msra.mxu0 0.0
    %473 = vmatprep.subr.mxu0 0.0
    %474 = vmatpush1.msra.mxu0 0.0
    %475 = vmatprep.subr.mxu0 0.0
    %476 = vmatpush1.msra.mxu0 0.0
    %477 = vmatprep.subr.mxu0 0.0
    %478 = vmatpush1.msra.mxu0 0.0
    %479 = vmatprep.subr.mxu0 0.0
    %480 = vmatpush1.msra.mxu0 0.0
    %481 = vmatprep.mubr.f32.mxu0 0.0
    %482 = vmatmul.mubr.f32.gmra.mrb[0].mxu0 %v412
    %v483 = vpop.f32.mrb[0].mxu0
    %v484 = vadd.f32 0.0, %v483
    %v485 = vpop.f32.mrb[0].mxu0
    %486 = vmatprep.mubr.f32.mxu0 0.0
    %487 = vmatmul.mubr.f32.gmra.mrb[0].mxu0 %v415
    %v488 = vpop.f32.mrb[0].mxu0
    %v489 = vadd.f32 0.0, %v488
    %v490 = vpop.f32.mrb[0].mxu0
    %491 = vdwg.mxu0
    %v493 = vlaneseq
    %v494 = vshrl.u32 %v493, 7
    %v495 = vsub.s32 0, %v494
    %v496 = vrot.slane %v205, %v495
    %v498 = vadd.f32 %v496, %v484
    %v499 = vadd.f32 %v496, %v489
    %500 = vrot.lane.b32.xlu0 %v197, 112
    %v501 = vpop.permute.xlu0 %500
    %502 = vrot.lane.b32.xlu0 %v202, 112
    %v503 = vpop.permute.xlu0 %502
    %504 = vrot.lane.b32.xlu0 %v197, 80
    %v505 = vpop.permute.xlu0 %504
    %506 = vrot.lane.b32.xlu0 %v202, 80
    %v507 = vpop.permute.xlu0 %506
    %v508 = vsel %vm212, %v501, 0
    %v510 = vsel %vm212, %v503, 0
    %v512 = vsel %vm212, %v505, 0
    %v514 = vsel %vm212, %v507, 0
    %516 = vmatprep.subr.mxu0 0.0
    %517 = vmatpush1.xpose.msra.mxu0 %v512
    %518 = vmatprep.subr.mxu0 0.0
    %519 = vmatpush1.xpose.msra.mxu0 %v514
    %520 = vmatprep.subr.mxu0 0.0
    %521 = vmatpush1.xpose.msra.mxu0 0.0
    %522 = vmatprep.subr.mxu0 0.0
    %523 = vmatpush1.xpose.msra.mxu0 0.0
    %524 = vmatprep.subr.mxu0 0.0
    %525 = vmatpush1.xpose.msra.mxu0 0.0
    %526 = vmatprep.subr.mxu0 0.0
    %527 = vmatpush1.xpose.msra.mxu0 0.0
    %528 = vmatprep.subr.mxu0 0.0
    %529 = vmatpush1.xpose.msra.mxu0 0.0
    %530 = vmatprep.subr.mxu0 0.0
    %531 = vmatpush1.xpose.msra.mxu0 0.0
    %532 = vmatprep.subr.mxu0 0.0
    %533 = vmatpush1.xpose.msra.mxu0 0.0
    %534 = vmatprep.subr.mxu0 0.0
    %535 = vmatpush1.xpose.msra.mxu0 0.0
    %536 = vmatprep.subr.mxu0 0.0
    %537 = vmatpush1.xpose.msra.mxu0 0.0
    %538 = vmatprep.subr.mxu0 0.0
    %539 = vmatpush1.xpose.msra.mxu0 0.0
    %540 = vmatprep.subr.mxu0 0.0
    %541 = vmatpush1.xpose.msra.mxu0 0.0
    %542 = vmatprep.subr.mxu0 0.0
    %543 = vmatpush1.xpose.msra.mxu0 0.0
    %544 = vmatprep.subr.mxu0 0.0
    %545 = vmatpush1.xpose.msra.mxu0 0.0
    %546 = vmatprep.subr.mxu0 0.0
    %547 = vmatpush1.xpose.msra.mxu0 0.0
    %548 = vmatprep.subr.mxu0 0.0
    %549 = vmatpush1.xpose.msra.mxu0 0.0
    %550 = vmatprep.subr.mxu0 0.0
    %551 = vmatpush1.xpose.msra.mxu0 0.0
    %552 = vmatprep.subr.mxu0 0.0
    %553 = vmatpush1.xpose.msra.mxu0 0.0
    %554 = vmatprep.subr.mxu0 0.0
    %555 = vmatpush1.xpose.msra.mxu0 0.0
    %556 = vmatprep.subr.mxu0 0.0
    %557 = vmatpush1.xpose.msra.mxu0 0.0
    %558 = vmatprep.subr.mxu0 0.0
    %559 = vmatpush1.xpose.msra.mxu0 0.0
    %560 = vmatprep.subr.mxu0 0.0
    %561 = vmatpush1.xpose.msra.mxu0 0.0
    %562 = vmatprep.subr.mxu0 0.0
    %563 = vmatpush1.xpose.msra.mxu0 0.0
    %564 = vmatprep.subr.mxu0 0.0
    %565 = vmatpush1.xpose.msra.mxu0 0.0
    %566 = vmatprep.subr.mxu0 0.0
    %567 = vmatpush1.xpose.msra.mxu0 0.0
    %568 = vmatprep.subr.mxu0 0.0
    %569 = vmatpush1.xpose.msra.mxu0 0.0
    %570 = vmatprep.subr.mxu0 0.0
    %571 = vmatpush1.xpose.msra.mxu0 0.0
    %572 = vmatprep.subr.mxu0 0.0
    %573 = vmatpush1.xpose.msra.mxu0 0.0
    %574 = vmatprep.subr.mxu0 0.0
    %575 = vmatpush1.xpose.msra.mxu0 0.0
    %576 = vmatprep.subr.mxu0 0.0
    %577 = vmatpush1.xpose.msra.mxu0 0.0
    %578 = vmatprep.subr.mxu0 0.0
    %579 = vmatpush1.xpose.msra.mxu0 0.0
    %580 = vmatprep.mubr.f32.mxu0 0.0
    %581 = vmatmul.mubr.f32.gmra.mrb[0].mxu0 %v508
    %v582 = vpop.f32.mrb[0].mxu0
    %v583 = vadd.f32 0.0, %v582
    %v584 = vpop.f32.mrb[0].mxu0
    %585 = vmatprep.mubr.f32.mxu0 0.0
    %586 = vmatmul.mubr.f32.gmra.mrb[0].mxu0 %v510
    %v587 = vpop.f32.mrb[0].mxu0
    %v588 = vadd.f32 0.0, %v587
    %v589 = vpop.f32.mrb[0].mxu0
    %590 = vdwg.mxu0
    %v591 = vmul.f32 %v583, 0.25
    %v592 = vmul.f32 %v588, 0.25
    %v593 = vadd.f32 %v591, %v63
    %v594 = vadd.f32 %v592, %v64
    %v595 = vsel %vm212, %v593, -inf
    %596 = vmax.xlane.f32.xlu0 %v595
    %v597 = vpop.xlane.xlu0 %596
    %v598 = vsel %vm212, %v594, -inf
    %599 = vmax.xlane.f32.xlu0 %v598
    %v600 = vpop.xlane.xlu0 %599
    %v601 = vsub.f32 %v593, %v597
    %v602 = vsub.f32 %v594, %v600
    %v603 = vmul.f32 %v601, 1.442695
    %v604 = vpow.pop %v603
    %v605 = vmul.f32 %v602, 1.442695
    %v606 = vpow.pop %v605
    %v607 = vsel %vm212, %v604, 0.0
    %608 = vadd.xlane.f32.xlu0 %v607
    %v609 = vpop.xlane.xlu0 %608
    %v610 = vsel %vm212, %v606, 0.0
    %611 = vadd.xlane.f32.xlu0 %v610
    %v612 = vpop.xlane.xlu0 %611
    %v613 = vrcp.pop %v609
    %v614 = vrcp.pop %v612
    %v615 = vmul.f32 %v604, %v613
    %v616 = vmul.f32 %v606, %v614
    %617 = vrot.lane.b32.xlu0 %v197, 48
    %v618 = vpop.permute.xlu0 %617
    %619 = vrot.lane.b32.xlu0 %v202, 48
    %v620 = vpop.permute.xlu0 %619
    %v624 = vsel %vm212, %v615, 0
    %v627 = vsel %vm212, %v616, 0
    %629 = vmatprep.subr.mxu0 0.0
    %630 = vmatpush1.msra.mxu0 %v618
    %631 = vmatprep.subr.mxu0 0.0
    %632 = vmatpush1.msra.mxu0 %v620
    %633 = vmatprep.subr.mxu0 0.0
    %634 = vmatpush1.msra.mxu0 0.0
    %635 = vmatprep.subr.mxu0 0.0
    %636 = vmatpush1.msra.mxu0 0.0
    %637 = vmatprep.subr.mxu0 0.0
    %638 = vmatpush1.msra.mxu0 0.0
    %639 = vmatprep.subr.mxu0 0.0
    %640 = vmatpush1.msra.mxu0 0.0
    %641 = vmatprep.subr.mxu0 0.0
    %642 = vmatpush1.msra.mxu0 0.0
    %643 = vmatprep.subr.mxu0 0.0
    %644 = vmatpush1.msra.mxu0 0.0
    %645 = vmatprep.subr.mxu0 0.0
    %646 = vmatpush1.msra.mxu0 0.0
    %647 = vmatprep.subr.mxu0 0.0
    %648 = vmatpush1.msra.mxu0 0.0
    %649 = vmatprep.subr.mxu0 0.0
    %650 = vmatpush1.msra.mxu0 0.0
    %651 = vmatprep.subr.mxu0 0.0
    %652 = vmatpush1.msra.mxu0 0.0
    %653 = vmatprep.subr.mxu0 0.0
    %654 = vmatpush1.msra.mxu0 0.0
    %655 = vmatprep.subr.mxu0 0.0
    %656 = vmatpush1.msra.mxu0 0.0
    %657 = vmatprep.subr.mxu0 0.0
    %658 = vmatpush1.msra.mxu0 0.0
    %659 = vmatprep.subr.mxu0 0.0
    %660 = vmatpush1.msra.mxu0 0.0
    %661 = vmatprep.subr.mxu0 0.0
    %662 = vmatpush1.msra.mxu0 0.0
    %663 = vmatprep.subr.mxu0 0.0
    %664 = vmatpush1.msra.mxu0 0.0
    %665 = vmatprep.subr.mxu0 0.0
    %666 = vmatpush1.msra.mxu0 0.0
    %667 = vmatprep.subr.mxu0 0.0
    %668 = vmatpush1.msra.mxu0 0.0
    %669 = vmatprep.subr.mxu0 0.0
    %670 = vmatpush1.msra.mxu0 0.0
    %671 = vmatprep.subr.mxu0 0.0
    %672 = vmatpush1.msra.mxu0 0.0
    %673 = vmatprep.subr.mxu0 0.0
    %674 = vmatpush1.msra.mxu0 0.0
    %675 = vmatprep.subr.mxu0 0.0
    %676 = vmatpush1.msra.mxu0 0.0
    %677 = vmatprep.subr.mxu0 0.0
    %678 = vmatpush1.msra.mxu0 0.0
    %679 = vmatprep.subr.mxu0 0.0
    %680 = vmatpush1.msra.mxu0 0.0
    %681 = vmatprep.subr.mxu0 0.0
    %682 = vmatpush1.msra.mxu0 0.0
    %683 = vmatprep.subr.mxu0 0.0
    %684 = vmatpush1.msra.mxu0 0.0
    %685 = vmatprep.subr.mxu0 0.0
    %686 = vmatpush1.msra.mxu0 0.0
    %687 = vmatprep.subr.mxu0 0.0
    %688 = vmatpush1.msra.mxu0 0.0
    %689 = vmatprep.subr.mxu0 0.0
    %690 = vmatpush1.msra.mxu0 0.0
    %691 = vmatprep.subr.mxu0 0.0
    %692 = vmatpush1.msra.mxu0 0.0
    %693 = vmatprep.mubr.f32.mxu0 0.0
    %694 = vmatmul.mubr.f32.gmra.mrb[0].mxu0 %v624
    %v695 = vpop.f32.mrb[0].mxu0
    %v696 = vadd.f32 0.0, %v695
    %v697 = vpop.f32.mrb[0].mxu0
    %698 = vmatprep.mubr.f32.mxu0 0.0
    %699 = vmatmul.mubr.f32.gmra.mrb[0].mxu0 %v627
    %v700 = vpop.f32.mrb[0].mxu0
    %v701 = vadd.f32 0.0, %v700
    %v702 = vpop.f32.mrb[0].mxu0
    %703 = vdwg.mxu0
    %v704 = vld [vmem:[%s7 + $0x10] sm:$0xff]
    %v705 = vld [vmem:[%s7 + $0x18] sm:$0xff]
    %v707 = vsel %vm212, %v696, 0
    %v710 = vsel %vm212, %v701, 0
    %712 = vmatprep.subr.mxu0 0.0
    %713 = vmatpush1.msra.mxu0 %v704
    %714 = vmatprep.subr.mxu0 0.0
    %715 = vmatpush1.msra.mxu0 %v705
    %716 = vmatprep.subr.mxu0 0.0
    %717 = vmatpush1.msra.mxu0 0.0
    %718 = vmatprep.subr.mxu0 0.0
    %719 = vmatpush1.msra.mxu0 0.0
    %720 = vmatprep.subr.mxu0 0.0
    %721 = vmatpush1.msra.mxu0 0.0
    %722 = vmatprep.subr.mxu0 0.0
    %723 = vmatpush1.msra.mxu0 0.0
    %724 = vmatprep.subr.mxu0 0.0
    %725 = vmatpush1.msra.mxu0 0.0
    %726 = vmatprep.subr.mxu0 0.0
    %727 = vmatpush1.msra.mxu0 0.0
    %728 = vmatprep.subr.mxu0 0.0
    %729 = vmatpush1.msra.mxu0 0.0
    %730 = vmatprep.subr.mxu0 0.0
    %731 = vmatpush1.msra.mxu0 0.0
    %732 = vmatprep.subr.mxu0 0.0
    %733 = vmatpush1.msra.mxu0 0.0
    %734 = vmatprep.subr.mxu0 0.0
    %735 = vmatpush1.msra.mxu0 0.0
    %736 = vmatprep.subr.mxu0 0.0
    %737 = vmatpush1.msra.mxu0 0.0
    %738 = vmatprep.subr.mxu0 0.0
    %739 = vmatpush1.msra.mxu0 0.0
    %740 = vmatprep.subr.mxu0 0.0
    %741 = vmatpush1.msra.mxu0 0.0
    %742 = vmatprep.subr.mxu0 0.0
    %743 = vmatpush1.msra.mxu0 0.0
    %744 = vmatprep.subr.mxu0 0.0
    %745 = vmatpush1.msra.mxu0 0.0
    %746 = vmatprep.subr.mxu0 0.0
    %747 = vmatpush1.msra.mxu0 0.0
    %748 = vmatprep.subr.mxu0 0.0
    %749 = vmatpush1.msra.mxu0 0.0
    %750 = vmatprep.subr.mxu0 0.0
    %751 = vmatpush1.msra.mxu0 0.0
    %752 = vmatprep.subr.mxu0 0.0
    %753 = vmatpush1.msra.mxu0 0.0
    %754 = vmatprep.subr.mxu0 0.0
    %755 = vmatpush1.msra.mxu0 0.0
    %756 = vmatprep.subr.mxu0 0.0
    %757 = vmatpush1.msra.mxu0 0.0
    %758 = vmatprep.subr.mxu0 0.0
    %759 = vmatpush1.msra.mxu0 0.0
    %760 = vmatprep.subr.mxu0 0.0
    %761 = vmatpush1.msra.mxu0 0.0
    %762 = vmatprep.subr.mxu0 0.0
    %763 = vmatpush1.msra.mxu0 0.0
    %764 = vmatprep.subr.mxu0 0.0
    %765 = vmatpush1.msra.mxu0 0.0
    %766 = vmatprep.subr.mxu0 0.0
    %767 = vmatpush1.msra.mxu0 0.0
    %768 = vmatprep.subr.mxu0 0.0
    %769 = vmatpush1.msra.mxu0 0.0
    %770 = vmatprep.subr.mxu0 0.0
    %771 = vmatpush1.msra.mxu0 0.0
    %772 = vmatprep.subr.mxu0 0.0
    %773 = vmatpush1.msra.mxu0 0.0
    %774 = vmatprep.subr.mxu0 0.0
    %775 = vmatpush1.msra.mxu0 0.0
    %776 = vmatprep.mubr.f32.mxu0 0.0
    %777 = vmatmul.mubr.f32.gmra.mrb[0].mxu0 %v707
    %v778 = vpop.f32.mrb[0].mxu0
    %v779 = vadd.f32 0.0, %v778
    %v780 = vpop.f32.mrb[0].mxu0
    %781 = vmatprep.mubr.f32.mxu0 0.0
    %782 = vmatmul.mubr.f32.gmra.mrb[0].mxu0 %v710
    %v783 = vpop.f32.mrb[0].mxu0
    %v784 = vadd.f32 0.0, %v783
    %v785 = vpop.f32.mrb[0].mxu0
    %786 = vdwg.mxu0
    %v787 = vadd.f32 %v498, %v779
    %v788 = vadd.f32 %v499, %v784
    %v789 = vadd.f32 %v787, %v111
    %v790 = vadd.f32 %v788, %v112
    %v791 = vld [vmem:[%s9] sm:$0x1]
    %v792 = vld [vmem:[%s10] sm:$0x1]
    %v793 = vsel %vm69, %v789, 0.0
    %794 = vadd.xlane.f32.xlu0 %v793
    %v795 = vpop.xlane.xlu0 %794
    %v796 = vsel %vm69, %v790, 0.0
    %797 = vadd.xlane.f32.xlu0 %v796
    %v798 = vpop.xlane.xlu0 %797
    %v799 = vmul.f32 %v795, %v76
    %v800 = vmul.f32 %v798, %v76
    %v801 = vsub.f32 %v789, %v799
    %v802 = vsub.f32 %v790, %v800
    %v803 = vmul.f32 %v801, %v801
    %v804 = vmul.f32 %v802, %v802
    %v805 = vsel %vm69, %v803, 0.0
    %806 = vadd.xlane.f32.xlu0 %v805
    %v807 = vpop.xlane.xlu0 %806
    %v808 = vsel %vm69, %v804, 0.0
    %809 = vadd.xlane.f32.xlu0 %v808
    %v810 = vpop.xlane.xlu0 %809
    %v811 = vmul.f32 %v807, %v76
    %v812 = vmul.f32 %v810, %v76
    %v813 = vadd.f32 %v811, 1e-12
    %v814 = vadd.f32 %v812, 1e-12
    %v815 = vrsqrt.pop %v813
    %v816 = vrsqrt.pop %v814
    %v817 = vmul.f32 %v801, %v815
    %v818 = vmul.f32 %v802, %v816
    %v820 = vlaneseq
    %v821 = vshrl.u32 %v820, 7
    %v822 = vsub.s32 0, %v821
    %v823 = vrot.slane %v791, %v822
    %v825 = vmul.f32 %v817, %v823
    %v826 = vmul.f32 %v818, %v823
    %v828 = vlaneseq
    %v829 = vshrl.u32 %v828, 7
    %v830 = vsub.s32 0, %v829
    %v831 = vrot.slane %v792, %v830
    %v833 = vadd.f32 %v825, %v831
    %v834 = vadd.f32 %v826, %v831
    %v835 = vld [vmem:[%s11] sm:$0xff]
    %v836 = vld [vmem:[%s11 + $0x8] sm:$0xff]
    %v837 = vld [vmem:[%s11 + $0x10] sm:$0xff]
    %v838 = vld [vmem:[%s11 + $0x18] sm:$0xff]
    %v839 = vld [vmem:[%s12] sm:$0x1]
    %v841 = vlaneseq
    %v842 = vshrl.u32 %v841, 7
    %v843 = vsub.s32 0, %v842
    %v844 = vrot.slane %v839, %v843
    %v847 = vsel %vm69, %v833, 0
    %v850 = vsel %vm69, %v834, 0
    %852 = vmatprep.subr.mxu0 0.0
    %853 = vmatpush1.msra.mxu0 %v835
    %854 = vmatprep.subr.mxu0 0.0
    %855 = vmatpush1.msra.mxu0 %v836
    %856 = vmatprep.subr.mxu0 0.0
    %857 = vmatpush1.msra.mxu0 %v837
    %858 = vmatprep.subr.mxu0 0.0
    %859 = vmatpush1.msra.mxu0 %v838
    %860 = vmatprep.subr.mxu0 0.0
    %861 = vmatpush1.msra.mxu0 0.0
    %862 = vmatprep.subr.mxu0 0.0
    %863 = vmatpush1.msra.mxu0 0.0
    %864 = vmatprep.subr.mxu0 0.0
    %865 = vmatpush1.msra.mxu0 0.0
    %866 = vmatprep.subr.mxu0 0.0
    %867 = vmatpush1.msra.mxu0 0.0
    %868 = vmatprep.subr.mxu0 0.0
    %869 = vmatpush1.msra.mxu0 0.0
    %870 = vmatprep.subr.mxu0 0.0
    %871 = vmatpush1.msra.mxu0 0.0
    %872 = vmatprep.subr.mxu0 0.0
    %873 = vmatpush1.msra.mxu0 0.0
    %874 = vmatprep.subr.mxu0 0.0
    %875 = vmatpush1.msra.mxu0 0.0
    %876 = vmatprep.subr.mxu0 0.0
    %877 = vmatpush1.msra.mxu0 0.0
    %878 = vmatprep.subr.mxu0 0.0
    %879 = vmatpush1.msra.mxu0 0.0
    %880 = vmatprep.subr.mxu0 0.0
    %881 = vmatpush1.msra.mxu0 0.0
    %882 = vmatprep.subr.mxu0 0.0
    %883 = vmatpush1.msra.mxu0 0.0
    %884 = vmatprep.subr.mxu0 0.0
    %885 = vmatpush1.msra.mxu0 0.0
    %886 = vmatprep.subr.mxu0 0.0
    %887 = vmatpush1.msra.mxu0 0.0
    %888 = vmatprep.subr.mxu0 0.0
    %889 = vmatpush1.msra.mxu0 0.0
    %890 = vmatprep.subr.mxu0 0.0
    %891 = vmatpush1.msra.mxu0 0.0
    %892 = vmatprep.subr.mxu0 0.0
    %893 = vmatpush1.msra.mxu0 0.0
    %894 = vmatprep.subr.mxu0 0.0
    %895 = vmatpush1.msra.mxu0 0.0
    %896 = vmatprep.subr.mxu0 0.0
    %897 = vmatpush1.msra.mxu0 0.0
    %898 = vmatprep.subr.mxu0 0.0
    %899 = vmatpush1.msra.mxu0 0.0
    %900 = vmatprep.subr.mxu0 0.0
    %901 = vmatpush1.msra.mxu0 0.0
    %902 = vmatprep.subr.mxu0 0.0
    %903 = vmatpush1.msra.mxu0 0.0
    %904 = vmatprep.subr.mxu0 0.0
    %905 = vmatpush1.msra.mxu0 0.0
    %906 = vmatprep.subr.mxu0 0.0
    %907 = vmatpush1.msra.mxu0 0.0
    %908 = vmatprep.subr.mxu0 0.0
    %909 = vmatpush1.msra.mxu0 0.0
    %910 = vmatprep.subr.mxu0 0.0
    %911 = vmatpush1.msra.mxu0 0.0
    %912 = vmatprep.subr.mxu0 0.0
    %913 = vmatpush1.msra.mxu0 0.0
    %914 = vmatprep.subr.mxu0 0.0
    %915 = vmatpush1.msra.mxu0 0.0
    %916 = vmatprep.mubr.f32.mxu0 0.0
    %917 = vmatmul.mubr.f32.gmra.mrb[0].mxu0 %v847
    %v918 = vpop.f32.mrb[0].mxu0
    %v919 = vadd.f32 %v844, %v918
    %v920 = vpop.f32.mrb[0].mxu0
    %921 = vmatprep.mubr.f32.mxu0 0.0
    %922 = vmatmul.mubr.f32.gmra.mrb[0].mxu0 %v850
    %v923 = vpop.f32.mrb[0].mxu0
    %v924 = vadd.f32 %v844, %v923
    %v925 = vpop.f32.mrb[0].mxu0
    %926 = vdwg.mxu0
    %v927 = vmul.f32 %v919, 0.5
    %v928 = vmul.f32 %v924, 0.5
    %v929 = vmul.f32 %v919, 0.044715
    %v930 = vmul.f32 %v924, 0.044715
    %v931 = vmul.f32 %v929, %v919
    %v932 = vmul.f32 %v930, %v924
    %v933 = vmul.f32 %v931, %v919
    %v934 = vmul.f32 %v932, %v924
    %v935 = vadd.f32 %v919, %v933
    %v936 = vadd.f32 %v924, %v934
    %v937 = vmul.f32 %v935, 0.7978846
    %v938 = vmul.f32 %v936, 0.7978846
    %v939 = vtanh.pop %v937
    %v940 = vtanh.pop %v938
    %v941 = vadd.f32 %v939, 1.0
    %v942 = vadd.f32 %v940, 1.0
    %v943 = vmul.f32 %v927, %v941
    %v944 = vmul.f32 %v928, %v942
    %v945 = vld [vmem:[%s13] sm:$0xff]
    %v946 = vld [vmem:[%s13 + $0x8] sm:$0xff]
    %v947 = vld [vmem:[%s13 + $0x10] sm:$0xff]
    %v948 = vld [vmem:[%s13 + $0x18] sm:$0xff]
    %v949 = vld [vmem:[%s13 + $0x20] sm:$0xff]
    %v950 = vld [vmem:[%s13 + $0x28] sm:$0xff]
    %v951 = vld [vmem:[%s13 + $0x30] sm:$0xff]
    %v952 = vld [vmem:[%s13 + $0x38] sm:$0xff]
    %v953 = vld [vmem:[%s14] sm:$0x1]
    %v955 = vlaneseq
    %v956 = vshrl.u32 %v955, 7
    %v957 = vsub.s32 0, %v956
    %v958 = vrot.slane %v953, %v957
    %vm960 = vcmask 523264
    %v962 = vsel %vm960, %v943, 0
    %v965 = vsel %vm960, %v944, 0
    %967 = vmatprep.subr.mxu0 0.0
    %968 = vmatpush1.msra.mxu0 %v945
    %969 = vmatprep.subr.mxu0 0.0
    %970 = vmatpush1.msra.mxu0 %v946
    %971 = vmatprep.subr.mxu0 0.0
    %972 = vmatpush1.msra.mxu0 %v947
    %973 = vmatprep.subr.mxu0 0.0
    %974 = vmatpush1.msra.mxu0 %v948
    %975 = vmatprep.subr.mxu0 0.0
    %976 = vmatpush1.msra.mxu0 %v949
    %977 = vmatprep.subr.mxu0 0.0
    %978 = vmatpush1.msra.mxu0 %v950
    %979 = vmatprep.subr.mxu0 0.0
    %980 = vmatpush1.msra.mxu0 %v951
    %981 = vmatprep.subr.mxu0 0.0
    %982 = vmatpush1.msra.mxu0 %v952
    %983 = vmatprep.subr.mxu0 0.0
    %984 = vmatpush1.msra.mxu0 0.0
    %985 = vmatprep.subr.mxu0 0.0
    %986 = vmatpush1.msra.mxu0 0.0
    %987 = vmatprep.subr.mxu0 0.0
    %988 = vmatpush1.msra.mxu0 0.0
    %989 = vmatprep.subr.mxu0 0.0
    %990 = vmatpush1.msra.mxu0 0.0
    %991 = vmatprep.subr.mxu0 0.0
    %992 = vmatpush1.msra.mxu0 0.0
    %993 = vmatprep.subr.mxu0 0.0
    %994 = vmatpush1.msra.mxu0 0.0
    %995 = vmatprep.subr.mxu0 0.0
    %996 = vmatpush1.msra.mxu0 0.0
    %997 = vmatprep.subr.mxu0 0.0
    %998 = vmatpush1.msra.mxu0 0.0
    %999 = vmatprep.subr.mxu0 0.0
    %1000 = vmatpush1.msra.mxu0 0.0
    %1001 = vmatprep.subr.mxu0 0.0
    %1002 = vmatpush1.msra.mxu0 0.0
    %1003 = vmatprep.subr.mxu0 0.0
    %1004 = vmatpush1.msra.mxu0 0.0
    %1005 = vmatprep.subr.mxu0 0.0
    %1006 = vmatpush1.msra.mxu0 0.0
    %1007 = vmatprep.subr.mxu0 0.0
    %1008 = vmatpush1.msra.mxu0 0.0
    %1009 = vmatprep.subr.mxu0 0.0
    %1010 = vmatpush1.msra.mxu0 0.0
    %1011 = vmatprep.subr.mxu0 0.0
    %1012 = vmatpush1.msra.mxu0 0.0
    %1013 = vmatprep.subr.mxu0 0.0
    %1014 = vmatpush1.msra.mxu0 0.0
    %1015 = vmatprep.subr.mxu0 0.0
    %1016 = vmatpush1.msra.mxu0 0.0
    %1017 = vmatprep.subr.mxu0 0.0
    %1018 = vmatpush1.msra.mxu0 0.0
    %1019 = vmatprep.subr.mxu0 0.0
    %1020 = vmatpush1.msra.mxu0 0.0
    %1021 = vmatprep.subr.mxu0 0.0
    %1022 = vmatpush1.msra.mxu0 0.0
    %1023 = vmatprep.subr.mxu0 0.0
    %1024 = vmatpush1.msra.mxu0 0.0
    %1025 = vmatprep.subr.mxu0 0.0
    %1026 = vmatpush1.msra.mxu0 0.0
    %1027 = vmatprep.subr.mxu0 0.0
    %1028 = vmatpush1.msra.mxu0 0.0
    %1029 = vmatprep.subr.mxu0 0.0
    %1030 = vmatpush1.msra.mxu0 0.0
    %1031 = vmatprep.mubr.f32.mxu0 0.0
    %1032 = vmatmul.mubr.f32.gmra.mrb[0].mxu0 %v962
    %v1033 = vpop.f32.mrb[0].mxu0
    %v1034 = vadd.f32 %v958, %v1033
    %v1035 = vpop.f32.mrb[0].mxu0
    %1036 = vmatprep.mubr.f32.mxu0 0.0
    %1037 = vmatmul.mubr.f32.gmra.mrb[0].mxu0 %v965
    %v1038 = vpop.f32.mrb[0].mxu0
    %v1039 = vadd.f32 %v958, %v1038
    %v1040 = vpop.f32.mrb[0].mxu0
    %1041 = vdwg.mxu0
    %v1042 = vadd.f32 %v1034, %v833
    %v1043 = vadd.f32 %v1039, %v834
    %v1044 = vld [vmem:[%s15] sm:$0x1]
    %v1045 = vld [vmem:[%s16] sm:$0x1]
    %v1046 = vsel %vm69, %v1042, 0.0
    %1047 = vadd.xlane.f32.xlu0 %v1046
    %v1048 = vpop.xlane.xlu0 %1047
    %v1049 = vsel %vm69, %v1043, 0.0
    %1050 = vadd.xlane.f32.xlu0 %v1049
    %v1051 = vpop.xlane.xlu0 %1050
    %v1052 = vmul.f32 %v1048, %v76
    %v1053 = vmul.f32 %v1051, %v76
    %v1054 = vsub.f32 %v1042, %v1052
    %v1055 = vsub.f32 %v1043, %v1053
    %v1056 = vmul.f32 %v1054, %v1054
    %v1057 = vmul.f32 %v1055, %v1055
    %v1058 = vsel %vm69, %v1056, 0.0
    %1059 = vadd.xlane.f32.xlu0 %v1058
    %v1060 = vpop.xlane.xlu0 %1059
    %v1061 = vsel %vm69, %v1057, 0.0
    %1062 = vadd.xlane.f32.xlu0 %v1061
    %v1063 = vpop.xlane.xlu0 %1062
    %v1064 = vmul.f32 %v1060, %v76
    %v1065 = vmul.f32 %v1063, %v76
    %v1066 = vadd.f32 %v1064, 1e-12
    %v1067 = vadd.f32 %v1065, 1e-12
    %v1068 = vrsqrt.pop %v1066
    %v1069 = vrsqrt.pop %v1067
    %v1070 = vmul.f32 %v1054, %v1068
    %v1071 = vmul.f32 %v1055, %v1069
    %v1073 = vlaneseq
    %v1074 = vshrl.u32 %v1073, 7
    %v1075 = vsub.s32 0, %v1074
    %v1076 = vrot.slane %v1044, %v1075
    %v1078 = vmul.f32 %v1070, %v1076
    %v1079 = vmul.f32 %v1071, %v1076
    %v1081 = vlaneseq
    %v1082 = vshrl.u32 %v1081, 7
    %v1083 = vsub.s32 0, %v1082
    %v1084 = vrot.slane %v1045, %v1083
    %v1086 = vadd.f32 %v1078, %v1084
    %v1087 = vadd.f32 %v1079, %v1084
    %s1088 = scalar_lea.vmem %s5, 32
    %v1089 = vld [vmem:[%s1088] sm:$0xff]
    %v1090 = vld [vmem:[%s1088 + $0x8] sm:$0xff]
    %v1091 = vld [vmem:[%s1088 + $0x10] sm:$0xff]
    %v1092 = vld [vmem:[%s1088 + $0x18] sm:$0xff]
    %s1093 = scalar_lea.vmem %s6, 1
    %v1094 = vld [vmem:[%s1093] sm:$0x1]
    %v1096 = vlaneseq
    %v1097 = vshrl.u32 %v1096, 7
    %v1098 = vsub.s32 0, %v1097
    %v1099 = vrot.slane %v1094, %v1098
    %v1102 = vsel %vm69, %v1086, 0
    %v1105 = vsel %vm69, %v1087, 0
    %1107 = vmatprep.subr.mxu0 0.0
    %1108 = vmatpush1.msra.mxu0 %v1089
    %1109 = vmatprep.subr.mxu0 0.0
    %1110 = vmatpush1.msra.mxu0 %v1090
    %1111 = vmatprep.subr.mxu0 0.0
    %1112 = vmatpush1.msra.mxu0 %v1091
    %1113 = vmatprep.subr.mxu0 0.0
    %1114 = vmatpush1.msra.mxu0 %v1092
    %1115 = vmatprep.subr.mxu0 0.0
    %1116 = vmatpush1.msra.mxu0 0.0
    %1117 = vmatprep.subr.mxu0 0.0
    %1118 = vmatpush1.msra.mxu0 0.0
    %1119 = vmatprep.subr.mxu0 0.0
    %1120 = vmatpush1.msra.mxu0 0.0
    %1121 = vmatprep.subr.mxu0 0.0
    %1122 = vmatpush1.msra.mxu0 0.0
    %1123 = vmatprep.subr.mxu0 0.0
    %1124 = vmatpush1.msra.mxu0 0.0
    %1125 = vmatprep.subr.mxu0 0.0
    %1126 = vmatpush1.msra.mxu0 0.0
    %1127 = vmatprep.subr.mxu0 0.0
    %1128 = vmatpush1.msra.mxu0 0.0
    %1129 = vmatprep.subr.mxu0 0.0
    %1130 = vmatpush1.msra.mxu0 0.0
    %1131 = vmatprep.subr.mxu0 0.0
    %1132 = vmatpush1.msra.mxu0 0.0
    %1133 = vmatprep.subr.mxu0 0.0
    %1134 = vmatpush1.msra.mxu0 0.0
    %1135 = vmatprep.subr.mxu0 0.0
    %1136 = vmatpush1.msra.mxu0 0.0
    %1137 = vmatprep.subr.mxu0 0.0
    %1138 = vmatpush1.msra.mxu0 0.0
    %1139 = vmatprep.subr.mxu0 0.0
    %1140 = vmatpush1.msra.mxu0 0.0
    %1141 = vmatprep.subr.mxu0 0.0
    %1142 = vmatpush1.msra.mxu0 0.0
    %1143 = vmatprep.subr.mxu0 0.0
    %1144 = vmatpush1.msra.mxu0 0.0
    %1145 = vmatprep.subr.mxu0 0.0
    %1146 = vmatpush1.msra.mxu0 0.0
    %1147 = vmatprep.subr.mxu0 0.0
    %1148 = vmatpush1.msra.mxu0 0.0
    %1149 = vmatprep.subr.mxu0 0.0
    %1150 = vmatpush1.msra.mxu0 0.0
    %1151 = vmatprep.subr.mxu0 0.0
    %1152 = vmatpush1.msra.mxu0 0.0
    %1153 = vmatprep.subr.mxu0 0.0
    %1154 = vmatpush1.msra.mxu0 0.0
    %1155 = vmatprep.subr.mxu0 0.0
    %1156 = vmatpush1.msra.mxu0 0.0
    %1157 = vmatprep.subr.mxu0 0.0
    %1158 = vmatpush1.msra.mxu0 0.0
    %1159 = vmatprep.subr.mxu0 0.0
    %1160 = vmatpush1.msra.mxu0 0.0
    %1161 = vmatprep.subr.mxu0 0.0
    %1162 = vmatpush1.msra.mxu0 0.0
    %1163 = vmatprep.subr.mxu0 0.0
    %1164 = vmatpush1.msra.mxu0 0.0
    %1165 = vmatprep.subr.mxu0 0.0
    %1166 = vmatpush1.msra.mxu0 0.0
    %1167 = vmatprep.subr.mxu0 0.0
    %1168 = vmatpush1.msra.mxu0 0.0
    %1169 = vmatprep.subr.mxu0 0.0
    %1170 = vmatpush1.msra.mxu0 0.0
    %1171 = vmatprep.mubr.f32.mxu0 0.0
    %1172 = vmatmul.mubr.f32.gmra.mrb[0].mxu0 %v1102
    %v1173 = vpop.f32.mrb[0].mxu0
    %v1174 = vadd.f32 %v1099, %v1173
    %v1175 = vpop.f32.mrb[0].mxu0
    %1176 = vmatprep.mubr.f32.mxu0 0.0
    %1177 = vmatmul.mubr.f32.gmra.mrb[0].mxu0 %v1105
    %v1178 = vpop.f32.mrb[0].mxu0
    %v1179 = vadd.f32 %v1099, %v1178
    %v1180 = vpop.f32.mrb[0].mxu0
    %1181 = vdwg.mxu0
    %s1182 = scalar_lea.vmem %s8, 1
    %v1183 = vld [vmem:[%s1182] sm:$0x1]
    %1186 = vrot.lane.b32.xlu0 %v1174, 96
    %v1187 = vpop.permute.xlu0 %1186
    %1188 = vrot.lane.b32.xlu0 %v1179, 96
    %v1189 = vpop.permute.xlu0 %1188
    %v1190 = vsel %vm212, %v1174, 0
    %v1192 = vsel %vm212, %v1179, 0
    %v1194 = vsel %vm212, %v1187, 0
    %v1196 = vsel %vm212, %v1189, 0
    %1198 = vmatprep.subr.mxu0 0.0
    %1199 = vmatpush1.xpose.msra.mxu0 %v1194
    %1200 = vmatprep.subr.mxu0 0.0
    %1201 = vmatpush1.xpose.msra.mxu0 %v1196
    %1202 = vmatprep.subr.mxu0 0.0
    %1203 = vmatpush1.xpose.msra.mxu0 0.0
    %1204 = vmatprep.subr.mxu0 0.0
    %1205 = vmatpush1.xpose.msra.mxu0 0.0
    %1206 = vmatprep.subr.mxu0 0.0
    %1207 = vmatpush1.xpose.msra.mxu0 0.0
    %1208 = vmatprep.subr.mxu0 0.0
    %1209 = vmatpush1.xpose.msra.mxu0 0.0
    %1210 = vmatprep.subr.mxu0 0.0
    %1211 = vmatpush1.xpose.msra.mxu0 0.0
    %1212 = vmatprep.subr.mxu0 0.0
    %1213 = vmatpush1.xpose.msra.mxu0 0.0
    %1214 = vmatprep.subr.mxu0 0.0
    %1215 = vmatpush1.xpose.msra.mxu0 0.0
    %1216 = vmatprep.subr.mxu0 0.0
    %1217 = vmatpush1.xpose.msra.mxu0 0.0
    %1218 = vmatprep.subr.mxu0 0.0
    %1219 = vmatpush1.xpose.msra.mxu0 0.0
    %1220 = vmatprep.subr.mxu0 0.0
    %1221 = vmatpush1.xpose.msra.mxu0 0.0
    %1222 = vmatprep.subr.mxu0 0.0
    %1223 = vmatpush1.xpose.msra.mxu0 0.0
    %1224 = vmatprep.subr.mxu0 0.0
    %1225 = vmatpush1.xpose.msra.mxu0 0.0
    %1226 = vmatprep.subr.mxu0 0.0
    %1227 = vmatpush1.xpose.msra.mxu0 0.0
    %1228 = vmatprep.subr.mxu0 0.0
    %1229 = vmatpush1.xpose.msra.mxu0 0.0
    %1230 = vmatprep.subr.mxu0 0.0
    %1231 = vmatpush1.xpose.msra.mxu0 0.0
    %1232 = vmatprep.subr.mxu0 0.0
    %1233 = vmatpush1.xpose.msra.mxu0 0.0
    %1234 = vmatprep.subr.mxu0 0.0
    %1235 = vmatpush1.xpose.msra.mxu0 0.0
    %1236 = vmatprep.subr.mxu0 0.0
    %1237 = vmatpush1.xpose.msra.mxu0 0.0
    %1238 = vmatprep.subr.mxu0 0.0
    %1239 = vmatpush1.xpose.msra.mxu0 0.0
    %1240 = vmatprep.subr.mxu0 0.0
    %1241 = vmatpush1.xpose.msra.mxu0 0.0
    %1242 = vmatprep.subr.mxu0 0.0
    %1243 = vmatpush1.xpose.msra.mxu0 0.0
    %1244 = vmatprep.subr.mxu0 0.0
    %1245 = vmatpush1.xpose.msra.mxu0 0.0
    %1246 = vmatprep.subr.mxu0 0.0
    %1247 = vmatpush1.xpose.msra.mxu0 0.0
    %1248 = vmatprep.subr.mxu0 0.0
    %1249 = vmatpush1.xpose.msra.mxu0 0.0
    %1250 = vmatprep.subr.mxu0 0.0
    %1251 = vmatpush1.xpose.msra.mxu0 0.0
    %1252 = vmatprep.subr.mxu0 0.0
    %1253 = vmatpush1.xpose.msra.mxu0 0.0
    %1254 = vmatprep.subr.mxu0 0.0
    %1255 = vmatpush1.xpose.msra.mxu0 0.0
    %1256 = vmatprep.subr.mxu0 0.0
    %1257 = vmatpush1.xpose.msra.mxu0 0.0
    %1258 = vmatprep.subr.mxu0 0.0
    %1259 = vmatpush1.xpose.msra.mxu0 0.0
    %1260 = vmatprep.subr.mxu0 0.0
    %1261 = vmatpush1.xpose.msra.mxu0 0.0
    %1262 = vmatprep.mubr.f32.mxu0 0.0
    %1263 = vmatmul.mubr.f32.gmra.mrb[0].mxu0 %v1190
    %v1264 = vpop.f32.mrb[0].mxu0
    %v1265 = vadd.f32 0.0, %v1264
    %v1266 = vpop.f32.mrb[0].mxu0
    %1267 = vmatprep.mubr.f32.mxu0 0.0
    %1268 = vmatmul.mubr.f32.gmra.mrb[0].mxu0 %v1192
    %v1269 = vpop.f32.mrb[0].mxu0
    %v1270 = vadd.f32 0.0, %v1269
    %v1271 = vpop.f32.mrb[0].mxu0
    %1272 = vdwg.mxu0
    %v1273 = vmul.f32 %v1265, 0.25
    %v1274 = vmul.f32 %v1270, 0.25
    %v1275 = vadd.f32 %v1273, %v63
    %v1276 = vadd.f32 %v1274, %v64
    %v1277 = vsel %vm212, %v1275, -inf
    %1278 = vmax.xlane.f32.xlu0 %v1277
    %v1279 = vpop.xlane.xlu0 %1278
    %v1280 = vsel %vm212, %v1276, -inf
    %1281 = vmax.xlane.f32.xlu0 %v1280
    %v1282 = vpop.xlane.xlu0 %1281
    %v1283 = vsub.f32 %v1275, %v1279
    %v1284 = vsub.f32 %v1276, %v1282
    %v1285 = vmul.f32 %v1283, 1.442695
    %v1286 = vpow.pop %v1285
    %v1287 = vmul.f32 %v1284, 1.442695
    %v1288 = vpow.pop %v1287
    %v1289 = vsel %vm212, %v1286, 0.0
    %1290 = vadd.xlane.f32.xlu0 %v1289
    %v1291 = vpop.xlane.xlu0 %1290
    %v1292 = vsel %vm212, %v1288, 0.0
    %1293 = vadd.xlane.f32.xlu0 %v1292
    %v1294 = vpop.xlane.xlu0 %1293
    %v1295 = vrcp.pop %v1291
    %v1296 = vrcp.pop %v1294
    %v1297 = vmul.f32 %v1286, %v1295
    %v1298 = vmul.f32 %v1288, %v1296
    %1299 = vrot.lane.b32.xlu0 %v1174, 64
    %v1300 = vpop.permute.xlu0 %1299
    %1301 = vrot.lane.b32.xlu0 %v1179, 64
    %v1302 = vpop.permute.xlu0 %1301
    %v1306 = vsel %vm212, %v1297, 0
    %v1309 = vsel %vm212, %v1298, 0
    %1311 = vmatprep.subr.mxu0 0.0
    %1312 = vmatpush1.msra.mxu0 %v1300
    %1313 = vmatprep.subr.mxu0 0.0
    %1314 = vmatpush1.msra.mxu0 %v1302
    %1315 = vmatprep.subr.mxu0 0.0
    %1316 = vmatpush1.msra.mxu0 0.0
    %1317 = vmatprep.subr.mxu0 0.0
    %1318 = vmatpush1.msra.mxu0 0.0
    %1319 = vmatprep.subr.mxu0 0.0
    %1320 = vmatpush1.msra.mxu0 0.0
    %1321 = vmatprep.subr.mxu0 0.0
    %1322 = vmatpush1.msra.mxu0 0.0
    %1323 = vmatprep.subr.mxu0 0.0
    %1324 = vmatpush1.msra.mxu0 0.0
    %1325 = vmatprep.subr.mxu0 0.0
    %1326 = vmatpush1.msra.mxu0 0.0
    %1327 = vmatprep.subr.mxu0 0.0
    %1328 = vmatpush1.msra.mxu0 0.0
    %1329 = vmatprep.subr.mxu0 0.0
    %1330 = vmatpush1.msra.mxu0 0.0
    %1331 = vmatprep.subr.mxu0 0.0
    %1332 = vmatpush1.msra.mxu0 0.0
    %1333 = vmatprep.subr.mxu0 0.0
    %1334 = vmatpush1.msra.mxu0 0.0
    %1335 = vmatprep.subr.mxu0 0.0
    %1336 = vmatpush1.msra.mxu0 0.0
    %1337 = vmatprep.subr.mxu0 0.0
    %1338 = vmatpush1.msra.mxu0 0.0
    %1339 = vmatprep.subr.mxu0 0.0
    %1340 = vmatpush1.msra.mxu0 0.0
    %1341 = vmatprep.subr.mxu0 0.0
    %1342 = vmatpush1.msra.mxu0 0.0
    %1343 = vmatprep.subr.mxu0 0.0
    %1344 = vmatpush1.msra.mxu0 0.0
    %1345 = vmatprep.subr.mxu0 0.0
    %1346 = vmatpush1.msra.mxu0 0.0
    %1347 = vmatprep.subr.mxu0 0.0
    %1348 = vmatpush1.msra.mxu0 0.0
    %1349 = vmatprep.subr.mxu0 0.0
    %1350 = vmatpush1.msra.mxu0 0.0
    %1351 = vmatprep.subr.mxu0 0.0
    %1352 = vmatpush1.msra.mxu0 0.0
    %1353 = vmatprep.subr.mxu0 0.0
    %1354 = vmatpush1.msra.mxu0 0.0
    %1355 = vmatprep.subr.mxu0 0.0
    %1356 = vmatpush1.msra.mxu0 0.0
    %1357 = vmatprep.subr.mxu0 0.0
    %1358 = vmatpush1.msra.mxu0 0.0
    %1359 = vmatprep.subr.mxu0 0.0
    %1360 = vmatpush1.msra.mxu0 0.0
    %1361 = vmatprep.subr.mxu0 0.0
    %1362 = vmatpush1.msra.mxu0 0.0
    %1363 = vmatprep.subr.mxu0 0.0
    %1364 = vmatpush1.msra.mxu0 0.0
    %1365 = vmatprep.subr.mxu0 0.0
    %1366 = vmatpush1.msra.mxu0 0.0
    %1367 = vmatprep.subr.mxu0 0.0
    %1368 = vmatpush1.msra.mxu0 0.0
    %1369 = vmatprep.subr.mxu0 0.0
    %1370 = vmatpush1.msra.mxu0 0.0
    %1371 = vmatprep.subr.mxu0 0.0
    %1372 = vmatpush1.msra.mxu0 0.0
    %1373 = vmatprep.subr.mxu0 0.0
    %1374 = vmatpush1.msra.mxu0 0.0
    %1375 = vmatprep.mubr.f32.mxu0 0.0
    %1376 = vmatmul.mubr.f32.gmra.mrb[0].mxu0 %v1306
    %v1377 = vpop.f32.mrb[0].mxu0
    %v1378 = vadd.f32 0.0, %v1377
    %v1379 = vpop.f32.mrb[0].mxu0
    %1380 = vmatprep.mubr.f32.mxu0 0.0
    %1381 = vmatmul.mubr.f32.gmra.mrb[0].mxu0 %v1309
    %v1382 = vpop.f32.mrb[0].mxu0
    %v1383 = vadd.f32 0.0, %v1382
    %v1384 = vpop.f32.mrb[0].mxu0
    %1385 = vdwg.mxu0
    %s1386 = scalar_lea.vmem %s7, 32
    %v1387 = vld [vmem:[%s1386] sm:$0xff]
    %v1388 = vld [vmem:[%s1386 + $0x8] sm:$0xff]
    %v1390 = vsel %vm212, %v1378, 0
    %v1393 = vsel %vm212, %v1383, 0
    %1395 = vmatprep.subr.mxu0 0.0
    %1396 = vmatpush1.msra.mxu0 %v1387
    %1397 = vmatprep.subr.mxu0 0.0
    %1398 = vmatpush1.msra.mxu0 %v1388
    %1399 = vmatprep.subr.mxu0 0.0
    %1400 = vmatpush1.msra.mxu0 0.0
    %1401 = vmatprep.subr.mxu0 0.0
    %1402 = vmatpush1.msra.mxu0 0.0
    %1403 = vmatprep.subr.mxu0 0.0
    %1404 = vmatpush1.msra.mxu0 0.0
    %1405 = vmatprep.subr.mxu0 0.0
    %1406 = vmatpush1.msra.mxu0 0.0
    %1407 = vmatprep.subr.mxu0 0.0
    %1408 = vmatpush1.msra.mxu0 0.0
    %1409 = vmatprep.subr.mxu0 0.0
    %1410 = vmatpush1.msra.mxu0 0.0
    %1411 = vmatprep.subr.mxu0 0.0
    %1412 = vmatpush1.msra.mxu0 0.0
    %1413 = vmatprep.subr.mxu0 0.0
    %1414 = vmatpush1.msra.mxu0 0.0
    %1415 = vmatprep.subr.mxu0 0.0
    %1416 = vmatpush1.msra.mxu0 0.0
    %1417 = vmatprep.subr.mxu0 0.0
    %1418 = vmatpush1.msra.mxu0 0.0
    %1419 = vmatprep.subr.mxu0 0.0
    %1420 = vmatpush1.msra.mxu0 0.0
    %1421 = vmatprep.subr.mxu0 0.0
    %1422 = vmatpush1.msra.mxu0 0.0
    %1423 = vmatprep.subr.mxu0 0.0
    %1424 = vmatpush1.msra.mxu0 0.0
    %1425 = vmatprep.subr.mxu0 0.0
    %1426 = vmatpush1.msra.mxu0 0.0
    %1427 = vmatprep.subr.mxu0 0.0
    %1428 = vmatpush1.msra.mxu0 0.0
    %1429 = vmatprep.subr.mxu0 0.0
    %1430 = vmatpush1.msra.mxu0 0.0
    %1431 = vmatprep.subr.mxu0 0.0
    %1432 = vmatpush1.msra.mxu0 0.0
    %1433 = vmatprep.subr.mxu0 0.0
    %1434 = vmatpush1.msra.mxu0 0.0
    %1435 = vmatprep.subr.mxu0 0.0
    %1436 = vmatpush1.msra.mxu0 0.0
    %1437 = vmatprep.subr.mxu0 0.0
    %1438 = vmatpush1.msra.mxu0 0.0
    %1439 = vmatprep.subr.mxu0 0.0
    %1440 = vmatpush1.msra.mxu0 0.0
    %1441 = vmatprep.subr.mxu0 0.0
    %1442 = vmatpush1.msra.mxu0 0.0
    %1443 = vmatprep.subr.mxu0 0.0
    %1444 = vmatpush1.msra.mxu0 0.0
    %1445 = vmatprep.subr.mxu0 0.0
    %1446 = vmatpush1.msra.mxu0 0.0
    %1447 = vmatprep.subr.mxu0 0.0
    %1448 = vmatpush1.msra.mxu0 0.0
    %1449 = vmatprep.subr.mxu0 0.0
    %1450 = vmatpush1.msra.mxu0 0.0
    %1451 = vmatprep.subr.mxu0 0.0
    %1452 = vmatpush1.msra.mxu0 0.0
    %1453 = vmatprep.subr.mxu0 0.0
    %1454 = vmatpush1.msra.mxu0 0.0
    %1455 = vmatprep.subr.mxu0 0.0
    %1456 = vmatpush1.msra.mxu0 0.0
    %1457 = vmatprep.subr.mxu0 0.0
    %1458 = vmatpush1.msra.mxu0 0.0
    %1459 = vmatprep.mubr.f32.mxu0 0.0
    %1460 = vmatmul.mubr.f32.gmra.mrb[0].mxu0 %v1390
    %v1461 = vpop.f32.mrb[0].mxu0
    %v1462 = vadd.f32 0.0, %v1461
    %v1463 = vpop.f32.mrb[0].mxu0
    %1464 = vmatprep.mubr.f32.mxu0 0.0
    %1465 = vmatmul.mubr.f32.gmra.mrb[0].mxu0 %v1393
    %v1466 = vpop.f32.mrb[0].mxu0
    %v1467 = vadd.f32 0.0, %v1466
    %v1468 = vpop.f32.mrb[0].mxu0
    %1469 = vdwg.mxu0
    %v1471 = vlaneseq
    %v1472 = vshrl.u32 %v1471, 7
    %v1473 = vsub.s32 0, %v1472
    %v1474 = vrot.slane %v1183, %v1473
    %v1476 = vadd.f32 %v1474, %v1462
    %v1477 = vadd.f32 %v1474, %v1467
    %1478 = vrot.lane.b32.xlu0 %v1174, 112
    %v1479 = vpop.permute.xlu0 %1478
    %1480 = vrot.lane.b32.xlu0 %v1179, 112
    %v1481 = vpop.permute.xlu0 %1480
    %1482 = vrot.lane.b32.xlu0 %v1174, 80
    %v1483 = vpop.permute.xlu0 %1482
    %1484 = vrot.lane.b32.xlu0 %v1179, 80
    %v1485 = vpop.permute.xlu0 %1484
    %v1486 = vsel %vm212, %v1479, 0
    %v1488 = vsel %vm212, %v1481, 0
    %v1490 = vsel %vm212, %v1483, 0
    %v1492 = vsel %vm212, %v1485, 0
    %1494 = vmatprep.subr.mxu0 0.0
    %1495 = vmatpush1.xpose.msra.mxu0 %v1490
    %1496 = vmatprep.subr.mxu0 0.0
    %1497 = vmatpush1.xpose.msra.mxu0 %v1492
    %1498 = vmatprep.subr.mxu0 0.0
    %1499 = vmatpush1.xpose.msra.mxu0 0.0
    %1500 = vmatprep.subr.mxu0 0.0
    %1501 = vmatpush1.xpose.msra.mxu0 0.0
    %1502 = vmatprep.subr.mxu0 0.0
    %1503 = vmatpush1.xpose.msra.mxu0 0.0
    %1504 = vmatprep.subr.mxu0 0.0
    %1505 = vmatpush1.xpose.msra.mxu0 0.0
    %1506 = vmatprep.subr.mxu0 0.0
    %1507 = vmatpush1.xpose.msra.mxu0 0.0
    %1508 = vmatprep.subr.mxu0 0.0
    %1509 = vmatpush1.xpose.msra.mxu0 0.0
    %1510 = vmatprep.subr.mxu0 0.0
    %1511 = vmatpush1.xpose.msra.mxu0 0.0
    %1512 = vmatprep.subr.mxu0 0.0
    %1513 = vmatpush1.xpose.msra.mxu0 0.0
    %1514 = vmatprep.subr.mxu0 0.0
    %1515 = vmatpush1.xpose.msra.mxu0 0.0
    %1516 = vmatprep.subr.mxu0 0.0
    %1517 = vmatpush1.xpose.msra.mxu0 0.0
    %1518 = vmatprep.subr.mxu0 0.0
    %1519 = vmatpush1.xpose.msra.mxu0 0.0
    %1520 = vmatprep.subr.mxu0 0.0
    %1521 = vmatpush1.xpose.msra.mxu0 0.0
    %1522 = vmatprep.subr.mxu0 0.0
    %1523 = vmatpush1.xpose.msra.mxu0 0.0
    %1524 = vmatprep.subr.mxu0 0.0
    %1525 = vmatpush1.xpose.msra.mxu0 0.0
    %1526 = vmatprep.subr.mxu0 0.0
    %1527 = vmatpush1.xpose.msra.mxu0 0.0
    %1528 = vmatprep.subr.mxu0 0.0
    %1529 = vmatpush1.xpose.msra.mxu0 0.0
    %1530 = vmatprep.subr.mxu0 0.0
    %1531 = vmatpush1.xpose.msra.mxu0 0.0
    %1532 = vmatprep.subr.mxu0 0.0
    %1533 = vmatpush1.xpose.msra.mxu0 0.0
    %1534 = vmatprep.subr.mxu0 0.0
    %1535 = vmatpush1.xpose.msra.mxu0 0.0
    %1536 = vmatprep.subr.mxu0 0.0
    %1537 = vmatpush1.xpose.msra.mxu0 0.0
    %1538 = vmatprep.subr.mxu0 0.0
    %1539 = vmatpush1.xpose.msra.mxu0 0.0
    %1540 = vmatprep.subr.mxu0 0.0
    %1541 = vmatpush1.xpose.msra.mxu0 0.0
    %1542 = vmatprep.subr.mxu0 0.0
    %1543 = vmatpush1.xpose.msra.mxu0 0.0
    %1544 = vmatprep.subr.mxu0 0.0
    %1545 = vmatpush1.xpose.msra.mxu0 0.0
    %1546 = vmatprep.subr.mxu0 0.0
    %1547 = vmatpush1.xpose.msra.mxu0 0.0
    %1548 = vmatprep.subr.mxu0 0.0
    %1549 = vmatpush1.xpose.msra.mxu0 0.0
    %1550 = vmatprep.subr.mxu0 0.0
    %1551 = vmatpush1.xpose.msra.mxu0 0.0
    %1552 = vmatprep.subr.mxu0 0.0
    %1553 = vmatpush1.xpose.msra.mxu0 0.0
    %1554 = vmatprep.subr.mxu0 0.0
    %1555 = vmatpush1.xpose.msra.mxu0 0.0
    %1556 = vmatprep.subr.mxu0 0.0
    %1557 = vmatpush1.xpose.msra.mxu0 0.0
    %1558 = vmatprep.mubr.f32.mxu0 0.0
    %1559 = vmatmul.mubr.f32.gmra.mrb[0].mxu0 %v1486
    %v1560 = vpop.f32.mrb[0].mxu0
    %v1561 = vadd.f32 0.0, %v1560
    %v1562 = vpop.f32.mrb[0].mxu0
    %1563 = vmatprep.mubr.f32.mxu0 0.0
    %1564 = vmatmul.mubr.f32.gmra.mrb[0].mxu0 %v1488
    %v1565 = vpop.f32.mrb[0].mxu0
    %v1566 = vadd.f32 0.0, %v1565
    %v1567 = vpop.f32.mrb[0].mxu0
    %1568 = vdwg.mxu0
    %v1569 = vmul.f32 %v1561, 0.25
    %v1570 = vmul.f32 %v1566, 0.25
    %v1571 = vadd.f32 %v1569, %v63
    %v1572 = vadd.f32 %v1570, %v64
    %v1573 = vsel %vm212, %v1571, -inf
    %1574 = vmax.xlane.f32.xlu0 %v1573
    %v1575 = vpop.xlane.xlu0 %1574
    %v1576 = vsel %vm212, %v1572, -inf
    %1577 = vmax.xlane.f32.xlu0 %v1576
    %v1578 = vpop.xlane.xlu0 %1577
    %v1579 = vsub.f32 %v1571, %v1575
    %v1580 = vsub.f32 %v1572, %v1578
    %v1581 = vmul.f32 %v1579, 1.442695
    %v1582 = vpow.pop %v1581
    %v1583 = vmul.f32 %v1580, 1.442695
    %v1584 = vpow.pop %v1583
    %v1585 = vsel %vm212, %v1582, 0.0
    %1586 = vadd.xlane.f32.xlu0 %v1585
    %v1587 = vpop.xlane.xlu0 %1586
    %v1588 = vsel %vm212, %v1584, 0.0
    %1589 = vadd.xlane.f32.xlu0 %v1588
    %v1590 = vpop.xlane.xlu0 %1589
    %v1591 = vrcp.pop %v1587
    %v1592 = vrcp.pop %v1590
    %v1593 = vmul.f32 %v1582, %v1591
    %v1594 = vmul.f32 %v1584, %v1592
    %1595 = vrot.lane.b32.xlu0 %v1174, 48
    %v1596 = vpop.permute.xlu0 %1595
    %1597 = vrot.lane.b32.xlu0 %v1179, 48
    %v1598 = vpop.permute.xlu0 %1597
    %v1602 = vsel %vm212, %v1593, 0
    %v1605 = vsel %vm212, %v1594, 0
    %1607 = vmatprep.subr.mxu0 0.0
    %1608 = vmatpush1.msra.mxu0 %v1596
    %1609 = vmatprep.subr.mxu0 0.0
    %1610 = vmatpush1.msra.mxu0 %v1598
    %1611 = vmatprep.subr.mxu0 0.0
    %1612 = vmatpush1.msra.mxu0 0.0
    %1613 = vmatprep.subr.mxu0 0.0
    %1614 = vmatpush1.msra.mxu0 0.0
    %1615 = vmatprep.subr.mxu0 0.0
    %1616 = vmatpush1.msra.mxu0 0.0
    %1617 = vmatprep.subr.mxu0 0.0
    %1618 = vmatpush1.msra.mxu0 0.0
    %1619 = vmatprep.subr.mxu0 0.0
    %1620 = vmatpush1.msra.mxu0 0.0
    %1621 = vmatprep.subr.mxu0 0.0
    %1622 = vmatpush1.msra.mxu0 0.0
    %1623 = vmatprep.subr.mxu0 0.0
    %1624 = vmatpush1.msra.mxu0 0.0
    %1625 = vmatprep.subr.mxu0 0.0
    %1626 = vmatpush1.msra.mxu0 0.0
    %1627 = vmatprep.subr.mxu0 0.0
    %1628 = vmatpush1.msra.mxu0 0.0
    %1629 = vmatprep.subr.mxu0 0.0
    %1630 = vmatpush1.msra.mxu0 0.0
    %1631 = vmatprep.subr.mxu0 0.0
    %1632 = vmatpush1.msra.mxu0 0.0
    %1633 = vmatprep.subr.mxu0 0.0
    %1634 = vmatpush1.msra.mxu0 0.0
    %1635 = vmatprep.subr.mxu0 0.0
    %1636 = vmatpush1.msra.mxu0 0.0
    %1637 = vmatprep.subr.mxu0 0.0
    %1638 = vmatpush1.msra.mxu0 0.0
    %1639 = vmatprep.subr.mxu0 0.0
    %1640 = vmatpush1.msra.mxu0 0.0
    %1641 = vmatprep.subr.mxu0 0.0
    %1642 = vmatpush1.msra.mxu0 0.0
    %1643 = vmatprep.subr.mxu0 0.0
    %1644 = vmatpush1.msra.mxu0 0.0
    %1645 = vmatprep.subr.mxu0 0.0
    %1646 = vmatpush1.msra.mxu0 0.0
    %1647 = vmatprep.subr.mxu0 0.0
    %1648 = vmatpush1.msra.mxu0 0.0
    %1649 = vmatprep.subr.mxu0 0.0
    %1650 = vmatpush1.msra.mxu0 0.0
    %1651 = vmatprep.subr.mxu0 0.0
    %1652 = vmatpush1.msra.mxu0 0.0
    %1653 = vmatprep.subr.mxu0 0.0
    %1654 = vmatpush1.msra.mxu0 0.0
    %1655 = vmatprep.subr.mxu0 0.0
    %1656 = vmatpush1.msra.mxu0 0.0
    %1657 = vmatprep.subr.mxu0 0.0
    %1658 = vmatpush1.msra.mxu0 0.0
    %1659 = vmatprep.subr.mxu0 0.0
    %1660 = vmatpush1.msra.mxu0 0.0
    %1661 = vmatprep.subr.mxu0 0.0
    %1662 = vmatpush1.msra.mxu0 0.0
    %1663 = vmatprep.subr.mxu0 0.0
    %1664 = vmatpush1.msra.mxu0 0.0
    %1665 = vmatprep.subr.mxu0 0.0
    %1666 = vmatpush1.msra.mxu0 0.0
    %1667 = vmatprep.subr.mxu0 0.0
    %1668 = vmatpush1.msra.mxu0 0.0
    %1669 = vmatprep.subr.mxu0 0.0
    %1670 = vmatpush1.msra.mxu0 0.0
    %1671 = vmatprep.mubr.f32.mxu0 0.0
    %1672 = vmatmul.mubr.f32.gmra.mrb[0].mxu0 %v1602
    %v1673 = vpop.f32.mrb[0].mxu0
    %v1674 = vadd.f32 0.0, %v1673
    %v1675 = vpop.f32.mrb[0].mxu0
    %1676 = vmatprep.mubr.f32.mxu0 0.0
    %1677 = vmatmul.mubr.f32.gmra.mrb[0].mxu0 %v1605
    %v1678 = vpop.f32.mrb[0].mxu0
    %v1679 = vadd.f32 0.0, %v1678
    %v1680 = vpop.f32.mrb[0].mxu0
    %1681 = vdwg.mxu0
    %v1682 = vld [vmem:[%s1386 + $0x10] sm:$0xff]
    %v1683 = vld [vmem:[%s1386 + $0x18] sm:$0xff]
    %v1685 = vsel %vm212, %v1674, 0
    %v1688 = vsel %vm212, %v1679, 0
    %1690 = vmatprep.subr.mxu0 0.0
    %1691 = vmatpush1.msra.mxu0 %v1682
    %1692 = vmatprep.subr.mxu0 0.0
    %1693 = vmatpush1.msra.mxu0 %v1683
    %1694 = vmatprep.subr.mxu0 0.0
    %1695 = vmatpush1.msra.mxu0 0.0
    %1696 = vmatprep.subr.mxu0 0.0
    %1697 = vmatpush1.msra.mxu0 0.0
    %1698 = vmatprep.subr.mxu0 0.0
    %1699 = vmatpush1.msra.mxu0 0.0
    %1700 = vmatprep.subr.mxu0 0.0
    %1701 = vmatpush1.msra.mxu0 0.0
    %1702 = vmatprep.subr.mxu0 0.0
    %1703 = vmatpush1.msra.mxu0 0.0
    %1704 = vmatprep.subr.mxu0 0.0
    %1705 = vmatpush1.msra.mxu0 0.0
    %1706 = vmatprep.subr.mxu0 0.0
    %1707 = vmatpush1.msra.mxu0 0.0
    %1708 = vmatprep.subr.mxu0 0.0
    %1709 = vmatpush1.msra.mxu0 0.0
    %1710 = vmatprep.subr.mxu0 0.0
    %1711 = vmatpush1.msra.mxu0 0.0
    %1712 = vmatprep.subr.mxu0 0.0
    %1713 = vmatpush1.msra.mxu0 0.0
    %1714 = vmatprep.subr.mxu0 0.0
    %1715 = vmatpush1.msra.mxu0 0.0
    %1716 = vmatprep.subr.mxu0 0.0
    %1717 = vmatpush1.msra.mxu0 0.0
    %1718 = vmatprep.subr.mxu0 0.0
    %1719 = vmatpush1.msra.mxu0 0.0
    %1720 = vmatprep.subr.mxu0 0.0
    %1721 = vmatpush1.msra.mxu0 0.0
    %1722 = vmatprep.subr.mxu0 0.0
    %1723 = vmatpush1.msra.mxu0 0.0
    %1724 = vmatprep.subr.mxu0 0.0
    %1725 = vmatpush1.msra.mxu0 0.0
    %1726 = vmatprep.subr.mxu0 0.0
    %1727 = vmatpush1.msra.mxu0 0.0
    %1728 = vmatprep.subr.mxu0 0.0
    %1729 = vmatpush1.msra.mxu0 0.0
    %1730 = vmatprep.subr.mxu0 0.0
    %1731 = vmatpush1.msra.mxu0 0.0
    %1732 = vmatprep.subr.mxu0 0.0
    %1733 = vmatpush1.msra.mxu0 0.0
    %1734 = vmatprep.subr.mxu0 0.0
    %1735 = vmatpush1.msra.mxu0 0.0
    %1736 = vmatprep.subr.mxu0 0.0
    %1737 = vmatpush1.msra.mxu0 0.0
    %1738 = vmatprep.subr.mxu0 0.0
    %1739 = vmatpush1.msra.mxu0 0.0
    %1740 = vmatprep.subr.mxu0 0.0
    %1741 = vmatpush1.msra.mxu0 0.0
    %1742 = vmatprep.subr.mxu0 0.0
    %1743 = vmatpush1.msra.mxu0 0.0
    %1744 = vmatprep.subr.mxu0 0.0
    %1745 = vmatpush1.msra.mxu0 0.0
    %1746 = vmatprep.subr.mxu0 0.0
    %1747 = vmatpush1.msra.mxu0 0.0
    %1748 = vmatprep.subr.mxu0 0.0
    %1749 = vmatpush1.msra.mxu0 0.0
    %1750 = vmatprep.subr.mxu0 0.0
    %1751 = vmatpush1.msra.mxu0 0.0
    %1752 = vmatprep.subr.mxu0 0.0
    %1753 = vmatpush1.msra.mxu0 0.0
    %1754 = vmatprep.mubr.f32.mxu0 0.0
    %1755 = vmatmul.mubr.f32.gmra.mrb[0].mxu0 %v1685
    %v1756 = vpop.f32.mrb[0].mxu0
    %v1757 = vadd.f32 0.0, %v1756
    %v1758 = vpop.f32.mrb[0].mxu0
    %1759 = vmatprep.mubr.f32.mxu0 0.0
    %1760 = vmatmul.mubr.f32.gmra.mrb[0].mxu0 %v1688
    %v1761 = vpop.f32.mrb[0].mxu0
    %v1762 = vadd.f32 0.0, %v1761
    %v1763 = vpop.f32.mrb[0].mxu0
    %1764 = vdwg.mxu0
    %v1765 = vadd.f32 %v1476, %v1757
    %v1766 = vadd.f32 %v1477, %v1762
    %v1767 = vadd.f32 %v1765, %v1086
    %v1768 = vadd.f32 %v1766, %v1087
    %s1769 = scalar_lea.vmem %s9, 1
    %v1770 = vld [vmem:[%s1769] sm:$0x1]
    %s1771 = scalar_lea.vmem %s10, 1
    %v1772 = vld [vmem:[%s1771] sm:$0x1]
    %v1773 = vsel %vm69, %v1767, 0.0
    %1774 = vadd.xlane.f32.xlu0 %v1773
    %v1775 = vpop.xlane.xlu0 %1774
    %v1776 = vsel %vm69, %v1768, 0.0
    %1777 = vadd.xlane.f32.xlu0 %v1776
    %v1778 = vpop.xlane.xlu0 %1777
    %v1779 = vmul.f32 %v1775, %v76
    %v1780 = vmul.f32 %v1778, %v76
    %v1781 = vsub.f32 %v1767, %v1779
    %v1782 = vsub.f32 %v1768, %v1780
    %v1783 = vmul.f32 %v1781, %v1781
    %v1784 = vmul.f32 %v1782, %v1782
    %v1785 = vsel %vm69, %v1783, 0.0
    %1786 = vadd.xlane.f32.xlu0 %v1785
    %v1787 = vpop.xlane.xlu0 %1786
    %v1788 = vsel %vm69, %v1784, 0.0
    %1789 = vadd.xlane.f32.xlu0 %v1788
    %v1790 = vpop.xlane.xlu0 %1789
    %v1791 = vmul.f32 %v1787, %v76
    %v1792 = vmul.f32 %v1790, %v76
    %v1793 = vadd.f32 %v1791, 1e-12
    %v1794 = vadd.f32 %v1792, 1e-12
    %v1795 = vrsqrt.pop %v1793
    %v1796 = vrsqrt.pop %v1794
    %v1797 = vmul.f32 %v1781, %v1795
    %v1798 = vmul.f32 %v1782, %v1796
    %v1800 = vlaneseq
    %v1801 = vshrl.u32 %v1800, 7
    %v1802 = vsub.s32 0, %v1801
    %v1803 = vrot.slane %v1770, %v1802
    %v1805 = vmul.f32 %v1797, %v1803
    %v1806 = vmul.f32 %v1798, %v1803
    %v1808 = vlaneseq
    %v1809 = vshrl.u32 %v1808, 7
    %v1810 = vsub.s32 0, %v1809
    %v1811 = vrot.slane %v1772, %v1810
    %v1813 = vadd.f32 %v1805, %v1811
    %v1814 = vadd.f32 %v1806, %v1811
    %s1815 = scalar_lea.vmem %s11, 32
    %v1816 = vld [vmem:[%s1815] sm:$0xff]
    %v1817 = vld [vmem:[%s1815 + $0x8] sm:$0xff]
    %v1818 = vld [vmem:[%s1815 + $0x10] sm:$0xff]
    %v1819 = vld [vmem:[%s1815 + $0x18] sm:$0xff]
    %s1820 = scalar_lea.vmem %s12, 1
    %v1821 = vld [vmem:[%s1820] sm:$0x1]
    %v1823 = vlaneseq
    %v1824 = vshrl.u32 %v1823, 7
    %v1825 = vsub.s32 0, %v1824
    %v1826 = vrot.slane %v1821, %v1825
    %v1829 = vsel %vm69, %v1813, 0
    %v1832 = vsel %vm69, %v1814, 0
    %1834 = vmatprep.subr.mxu0 0.0
    %1835 = vmatpush1.msra.mxu0 %v1816
    %1836 = vmatprep.subr.mxu0 0.0
    %1837 = vmatpush1.msra.mxu0 %v1817
    %1838 = vmatprep.subr.mxu0 0.0
    %1839 = vmatpush1.msra.mxu0 %v1818
    %1840 = vmatprep.subr.mxu0 0.0
    %1841 = vmatpush1.msra.mxu0 %v1819
    %1842 = vmatprep.subr.mxu0 0.0
    %1843 = vmatpush1.msra.mxu0 0.0
    %1844 = vmatprep.subr.mxu0 0.0
    %1845 = vmatpush1.msra.mxu0 0.0
    %1846 = vmatprep.subr.mxu0 0.0
    %1847 = vmatpush1.msra.mxu0 0.0
    %1848 = vmatprep.subr.mxu0 0.0
    %1849 = vmatpush1.msra.mxu0 0.0
    %1850 = vmatprep.subr.mxu0 0.0
    %1851 = vmatpush1.msra.mxu0 0.0
    %1852 = vmatprep.subr.mxu0 0.0
    %1853 = vmatpush1.msra.mxu0 0.0
    %1854 = vmatprep.subr.mxu0 0.0
    %1855 = vmatpush1.msra.mxu0 0.0
    %1856 = vmatprep.subr.mxu0 0.0
    %1857 = vmatpush1.msra.mxu0 0.0
    %1858 = vmatprep.subr.mxu0 0.0
    %1859 = vmatpush1.msra.mxu0 0.0
    %1860 = vmatprep.subr.mxu0 0.0
    %1861 = vmatpush1.msra.mxu0 0.0
    %1862 = vmatprep.subr.mxu0 0.0
    %1863 = vmatpush1.msra.mxu0 0.0
    %1864 = vmatprep.subr.mxu0 0.0
    %1865 = vmatpush1.msra.mxu0 0.0
    %1866 = vmatprep.subr.mxu0 0.0
    %1867 = vmatpush1.msra.mxu0 0.0
    %1868 = vmatprep.subr.mxu0 0.0
    %1869 = vmatpush1.msra.mxu0 0.0
    %1870 = vmatprep.subr.mxu0 0.0
    %1871 = vmatpush1.msra.mxu0 0.0
    %1872 = vmatprep.subr.mxu0 0.0
    %1873 = vmatpush1.msra.mxu0 0.0
    %1874 = vmatprep.subr.mxu0 0.0
    %1875 = vmatpush1.msra.mxu0 0.0
    %1876 = vmatprep.subr.mxu0 0.0
    %1877 = vmatpush1.msra.mxu0 0.0
    %1878 = vmatprep.subr.mxu0 0.0
    %1879 = vmatpush1.msra.mxu0 0.0
    %1880 = vmatprep.subr.mxu0 0.0
    %1881 = vmatpush1.msra.mxu0 0.0
    %1882 = vmatprep.subr.mxu0 0.0
    %1883 = vmatpush1.msra.mxu0 0.0
    %1884 = vmatprep.subr.mxu0 0.0
    %1885 = vmatpush1.msra.mxu0 0.0
    %1886 = vmatprep.subr.mxu0 0.0
    %1887 = vmatpush1.msra.mxu0 0.0
    %1888 = vmatprep.subr.mxu0 0.0
    %1889 = vmatpush1.msra.mxu0 0.0
    %1890 = vmatprep.subr.mxu0 0.0
    %1891 = vmatpush1.msra.mxu0 0.0
    %1892 = vmatprep.subr.mxu0 0.0
    %1893 = vmatpush1.msra.mxu0 0.0
    %1894 = vmatprep.subr.mxu0 0.0
    %1895 = vmatpush1.msra.mxu0 0.0
    %1896 = vmatprep.subr.mxu0 0.0
    %1897 = vmatpush1.msra.mxu0 0.0
    %1898 = vmatprep.mubr.f32.mxu0 0.0
    %1899 = vmatmul.mubr.f32.gmra.mrb[0].mxu0 %v1829
    %v1900 = vpop.f32.mrb[0].mxu0
    %v1901 = vadd.f32 %v1826, %v1900
    %v1902 = vpop.f32.mrb[0].mxu0
    %1903 = vmatprep.mubr.f32.mxu0 0.0
    %1904 = vmatmul.mubr.f32.gmra.mrb[0].mxu0 %v1832
    %v1905 = vpop.f32.mrb[0].mxu0
    %v1906 = vadd.f32 %v1826, %v1905
    %v1907 = vpop.f32.mrb[0].mxu0
    %1908 = vdwg.mxu0
    %v1909 = vmul.f32 %v1901, 0.5
    %v1910 = vmul.f32 %v1906, 0.5
    %v1911 = vmul.f32 %v1901, 0.044715
    %v1912 = vmul.f32 %v1906, 0.044715
    %v1913 = vmul.f32 %v1911, %v1901
    %v1914 = vmul.f32 %v1912, %v1906
    %v1915 = vmul.f32 %v1913, %v1901
    %v1916 = vmul.f32 %v1914, %v1906
    %v1917 = vadd.f32 %v1901, %v1915
    %v1918 = vadd.f32 %v1906, %v1916
    %v1919 = vmul.f32 %v1917, 0.7978846
    %v1920 = vmul.f32 %v1918, 0.7978846
    %v1921 = vtanh.pop %v1919
    %v1922 = vtanh.pop %v1920
    %v1923 = vadd.f32 %v1921, 1.0
    %v1924 = vadd.f32 %v1922, 1.0
    %v1925 = vmul.f32 %v1909, %v1923
    %v1926 = vmul.f32 %v1910, %v1924
    %s1927 = scalar_lea.vmem %s13, 64
    %v1928 = vld [vmem:[%s1927] sm:$0xff]
    %v1929 = vld [vmem:[%s1927 + $0x8] sm:$0xff]
    %v1930 = vld [vmem:[%s1927 + $0x10] sm:$0xff]
    %v1931 = vld [vmem:[%s1927 + $0x18] sm:$0xff]
    %v1932 = vld [vmem:[%s1927 + $0x20] sm:$0xff]
    %v1933 = vld [vmem:[%s1927 + $0x28] sm:$0xff]
    %v1934 = vld [vmem:[%s1927 + $0x30] sm:$0xff]
    %v1935 = vld [vmem:[%s1927 + $0x38] sm:$0xff]
    %s1936 = scalar_lea.vmem %s14, 1
    %v1937 = vld [vmem:[%s1936] sm:$0x1]
    %v1939 = vlaneseq
    %v1940 = vshrl.u32 %v1939, 7
    %v1941 = vsub.s32 0, %v1940
    %v1942 = vrot.slane %v1937, %v1941
    %v1945 = vsel %vm960, %v1925, 0
    %v1948 = vsel %vm960, %v1926, 0
    %1950 = vmatprep.subr.mxu0 0.0
    %1951 = vmatpush1.msra.mxu0 %v1928
    %1952 = vmatprep.subr.mxu0 0.0
    %1953 = vmatpush1.msra.mxu0 %v1929
    %1954 = vmatprep.subr.mxu0 0.0
    %1955 = vmatpush1.msra.mxu0 %v1930
    %1956 = vmatprep.subr.mxu0 0.0
    %1957 = vmatpush1.msra.mxu0 %v1931
    %1958 = vmatprep.subr.mxu0 0.0
    %1959 = vmatpush1.msra.mxu0 %v1932
    %1960 = vmatprep.subr.mxu0 0.0
    %1961 = vmatpush1.msra.mxu0 %v1933
    %1962 = vmatprep.subr.mxu0 0.0
    %1963 = vmatpush1.msra.mxu0 %v1934
    %1964 = vmatprep.subr.mxu0 0.0
    %1965 = vmatpush1.msra.mxu0 %v1935
    %1966 = vmatprep.subr.mxu0 0.0
    %1967 = vmatpush1.msra.mxu0 0.0
    %1968 = vmatprep.subr.mxu0 0.0
    %1969 = vmatpush1.msra.mxu0 0.0
    %1970 = vmatprep.subr.mxu0 0.0
    %1971 = vmatpush1.msra.mxu0 0.0
    %1972 = vmatprep.subr.mxu0 0.0
    %1973 = vmatpush1.msra.mxu0 0.0
    %1974 = vmatprep.subr.mxu0 0.0
    %1975 = vmatpush1.msra.mxu0 0.0
    %1976 = vmatprep.subr.mxu0 0.0
    %1977 = vmatpush1.msra.mxu0 0.0
    %1978 = vmatprep.subr.mxu0 0.0
    %1979 = vmatpush1.msra.mxu0 0.0
    %1980 = vmatprep.subr.mxu0 0.0
    %1981 = vmatpush1.msra.mxu0 0.0
    %1982 = vmatprep.subr.mxu0 0.0
    %1983 = vmatpush1.msra.mxu0 0.0
    %1984 = vmatprep.subr.mxu0 0.0
    %1985 = vmatpush1.msra.mxu0 0.0
    %1986 = vmatprep.subr.mxu0 0.0
    %1987 = vmatpush1.msra.mxu0 0.0
    %1988 = vmatprep.subr.mxu0 0.0
    %1989 = vmatpush1.msra.mxu0 0.0
    %1990 = vmatprep.subr.mxu0 0.0
    %1991 = vmatpush1.msra.mxu0 0.0
    %1992 = vmatprep.subr.mxu0 0.0
    %1993 = vmatpush1.msra.mxu0 0.0
    %1994 = vmatprep.subr.mxu0 0.0
    %1995 = vmatpush1.msra.mxu0 0.0
    %1996 = vmatprep.subr.mxu0 0.0
    %1997 = vmatpush1.msra.mxu0 0.0
    %1998 = vmatprep.subr.mxu0 0.0
    %1999 = vmatpush1.msra.mxu0 0.0
    %2000 = vmatprep.subr.mxu0 0.0
    %2001 = vmatpush1.msra.mxu0 0.0
    %2002 = vmatprep.subr.mxu0 0.0
    %2003 = vmatpush1.msra.mxu0 0.0
    %2004 = vmatprep.subr.mxu0 0.0
    %2005 = vmatpush1.msra.mxu0 0.0
    %2006 = vmatprep.subr.mxu0 0.0
    %2007 = vmatpush1.msra.mxu0 0.0
    %2008 = vmatprep.subr.mxu0 0.0
    %2009 = vmatpush1.msra.mxu0 0.0
    %2010 = vmatprep.subr.mxu0 0.0
    %2011 = vmatpush1.msra.mxu0 0.0
    %2012 = vmatprep.subr.mxu0 0.0
    %2013 = vmatpush1.msra.mxu0 0.0
    %2014 = vmatprep.mubr.f32.mxu0 0.0
    %2015 = vmatmul.mubr.f32.gmra.mrb[0].mxu0 %v1945
    %v2016 = vpop.f32.mrb[0].mxu0
    %v2017 = vadd.f32 %v1942, %v2016
    %v2018 = vpop.f32.mrb[0].mxu0
    %2019 = vmatprep.mubr.f32.mxu0 0.0
    %2020 = vmatmul.mubr.f32.gmra.mrb[0].mxu0 %v1948
    %v2021 = vpop.f32.mrb[0].mxu0
    %v2022 = vadd.f32 %v1942, %v2021
    %v2023 = vpop.f32.mrb[0].mxu0
    %2024 = vdwg.mxu0
    %v2025 = vadd.f32 %v2017, %v1813
    %v2026 = vadd.f32 %v2022, %v1814
    %s2027 = scalar_lea.vmem %s15, 1
    %v2028 = vld [vmem:[%s2027] sm:$0x1]
    %s2029 = scalar_lea.vmem %s16, 1
    %v2030 = vld [vmem:[%s2029] sm:$0x1]
    %v2031 = vsel %vm69, %v2025, 0.0
    %2032 = vadd.xlane.f32.xlu0 %v2031
    %v2033 = vpop.xlane.xlu0 %2032
    %v2034 = vsel %vm69, %v2026, 0.0
    %2035 = vadd.xlane.f32.xlu0 %v2034
    %v2036 = vpop.xlane.xlu0 %2035
    %v2037 = vmul.f32 %v2033, %v76
    %v2038 = vmul.f32 %v2036, %v76
    %v2039 = vsub.f32 %v2025, %v2037
    %v2040 = vsub.f32 %v2026, %v2038
    %v2041 = vmul.f32 %v2039, %v2039
    %v2042 = vmul.f32 %v2040, %v2040
    %v2043 = vsel %vm69, %v2041, 0.0
    %2044 = vadd.xlane.f32.xlu0 %v2043
    %v2045 = vpop.xlane.xlu0 %2044
    %v2046 = vsel %vm69, %v2042, 0.0
    %2047 = vadd.xlane.f32.xlu0 %v2046
    %v2048 = vpop.xlane.xlu0 %2047
    %v2049 = vmul.f32 %v2045, %v76
    %v2050 = vmul.f32 %v2048, %v76
    %v2051 = vadd.f32 %v2049, 1e-12
    %v2052 = vadd.f32 %v2050, 1e-12
    %v2053 = vrsqrt.pop %v2051
    %v2054 = vrsqrt.pop %v2052
    %v2055 = vmul.f32 %v2039, %v2053
    %v2056 = vmul.f32 %v2040, %v2054
    %v2058 = vlaneseq
    %v2059 = vshrl.u32 %v2058, 7
    %v2060 = vsub.s32 0, %v2059
    %v2061 = vrot.slane %v2028, %v2060
    %v2063 = vmul.f32 %v2055, %v2061
    %v2064 = vmul.f32 %v2056, %v2061
    %v2066 = vlaneseq
    %v2067 = vshrl.u32 %v2066, 7
    %v2068 = vsub.s32 0, %v2067
    %v2069 = vrot.slane %v2030, %v2068
    %v2071 = vadd.f32 %v2063, %v2069
    %v2072 = vadd.f32 %v2064, %v2069
    %v2074 = vrot.slane %v2072, 7
    %vm2076 = vcmask 1040384
    %v2077 = vsel %vm2076, %v2071, %v2074
    %vm2078 = vcmask 254976
    %2079 = vst.msk [vmem:[#allocation2] sm:$0x3] %vm2078, %v2077
    // Predicated region
    $region78: #{simcse_forward.1} parent=1 // pred_check
      _
    $region79: #{simcse_forward.1} parent=1 // pred_check_branch
      %2081 = sbr.rel (0) target = $region81
    $region80: #{simcse_forward.1} parent=1 // pred_region
      %s2083 = ssub.s32 32, 32
      %2084 = vsyncadd [#allocation3], %s2083
      %s2086 = sshll.u32 [#allocation2], 4
      %s2087 = int_to_ptr.vmem [resolvable:$true] %s2086
      %2089 = dma.vmem_to_hbm [thread:$0]  %s2087, 32, %s19, [#allocation3]
    $region81: #{simcse_forward.1} parent=1 // pred_fallthru
      _
    // Predicated region
    $region82: #{simcse_forward.1} parent=1 // pred_check
      _
    $region83: #{simcse_forward.1} parent=1 // pred_check_branch
      %2091 = sbr.rel (0) target = $region85
    $region84: #{simcse_forward.1} parent=1 // pred_region
      %2092 = dma.done [#allocation3], 32
    $region85: #{simcse_forward.1} parent=1 // pred_fallthru
      _
    %2093 = vsyncpa [#allocation3], 1

</llo_original>
